<compile_context>
chip_gen: v6e
topology: v6e:2x2x1
jax: 0.10.0
libtpu: 0.0.40
codegen_flags: <defaults>
</compile_context>

<pallas_src>
import jax
import jax.numpy as jnp
from jax import lax
from jax.experimental import pallas as pl
from jax.experimental.pallas import tpu as pltpu


def _pipe_resident_kernel(x_ref, w_ref, b_ref, o_ref):
    """All pipeline layers on one micro-batch tile (weights VMEM-resident).

    x_ref: (mb, H) f32     micro-batch activation tile (auto double-buffered)
    w_ref: (L, H, H) bf16  all ranks' layer weights, VMEM-resident
    b_ref: (L, 1, H) f32   all ranks' layer biases, VMEM-resident
    o_ref: (mb, H) f32
    """
    n_layers = w_ref.shape[0]
    h0 = x_ref[...].astype(jnp.bfloat16)  # bf16 inter-layer carry

    def layer(l, h):
        # bf16 MXU operands, f32 accumulation; bias add + ReLU in f32
        # (v5e's VPU has no bf16 ALU ops).
        y = jnp.dot(h, w_ref[l], preferred_element_type=jnp.float32)
        y = jnp.maximum(y + b_ref[l], 0.0)
        return y.astype(jnp.bfloat16)

    h = lax.fori_loop(0, n_layers, layer, h0, unroll=True)
    o_ref[...] = h.astype(o_ref.dtype)


def _pipe_streaming_kernel(x_ref, w_ref, b_ref, o_ref, h_ref):
    """One (micro-batch, layer) grid step; activation carried in VMEM scratch.

    Grid = (chunks, L): the layer axis streams one (H, H) weight block per
    step (auto double-buffered -> next layer's weight DMA overlaps this
    layer's matmul), so weight VMEM is O(H^2) instead of O(L*H^2).
    """
    l = pl.program_id(1)

    @pl.when(l == 0)
    def _():
        h_ref[...] = x_ref[...].astype(jnp.bfloat16)

    y = jnp.dot(h_ref[...], w_ref[0], preferred_element_type=jnp.float32)
    y = jnp.maximum(y + b_ref[0], 0.0)
    h_ref[...] = y.astype(jnp.bfloat16)

    @pl.when(l == pl.num_programs(1) - 1)
    def _():
        o_ref[...] = y.astype(o_ref.dtype)


class PallasPipe:
    """Single-device simulation of torch `Pipe` over a Sequential of Linear+ReLU.

    All `world_size` stages live on one chip, so the Send/Recv hand-off is an
    identity and the whole pipeline fuses into a single kernel.
    """

    # Above this parameter footprint, switch to the layer-streaming grid so
    # the kernel survives v7x's 64 MiB-per-TensorCore VMEM.
    _RESIDENT_PARAM_BUDGET = 24 << 20  # bytes

    def __init__(self, w_all, b_all, shape, chunks=1, world_size=2,
                 layer_streaming=None):
        # w_all: [n_layers, H, H] (pre-transposed to [in, out]), b_all: [n_layers, 1, H]
        n_layers = int(w_all.shape[0])
        assert n_layers % world_size == 0, "layers must divide evenly across ranks"
        assert shape[0] % chunks == 0, "batch must divide evenly into micro-batches"
        self.world_size = world_size
        self.chunks = chunks
        self.n_layers = n_layers
        self.per_rank = n_layers // world_size
        # bf16 weights (halves HBM->VMEM DMA; native MXU operand on v5e/v6e/v7x).
        # NOTE: precision trade-off vs f32 torch Linear; error compounds with L/H.
        # TODO(synk): optional fp8 weight storage (+per-layer scale) on v7x.
        self.w_all = w_all.astype(jnp.bfloat16)
        self.b_all = b_all.astype(jnp.float32)
        shape = list(shape)
        shape[0] //= chunks
        self.shape = shape  # per-micro-batch shape, as in the torch module
        self._param_bytes = int(self.w_all.size) * 2 + int(self.b_all.size) * 4
        if layer_streaming is None:
            layer_streaming = self._param_bytes > self._RESIDENT_PARAM_BUDGET
        self.layer_streaming = layer_streaming
        self._weights_single_buffered = True  # pl.Buffered(1); fallback if unsupported

    # ---------------------------------------------------------------- helpers

    def _vmem_limit_bytes(self, mb, hid, resident):
        act = 2 * 2 * mb * hid * 4            # double-buffered (mb,H) f32 in + out tiles
        if resident:
            w = self._param_bytes
            if not self._weights_single_buffered:
                w *= 2
            need = w + act
        else:
            w = 2 * (hid * hid * 2 + hid * 4)  # double-buffered one-layer weight + bias
            need = w + act + mb * hid * 2      # + bf16 activation scratch
        # Headroom for Mosaic internal scratch; capped at v7x's 64 MiB per TC.
        return int(min(max(2 * need + (4 << 20), 16 << 20), 64 << 20))

    # ---------------------------------------------------------------- forward

    def forward(self, x):
        # TODO(synk): on a real multi-chip pipeline the per-stage hand-off is
        # pltpu.make_async_remote_copy + DMA semaphores + get_barrier_semaphore
        # (collective_id), with the RDMA send of micro-batch i overlapped with
        # the compute of micro-batch i+1.  Single-device simulation makes the
        # hand-off an identity, so all ranks' layers fuse into one kernel.
        batch, hid = x.shape
        assert batch % self.chunks == 0
        mb = batch // self.chunks
        assert mb % 8 == 0 and hid % 128 == 0, "tiles must be (8,128)-aligned"

        if self.layer_streaming:
            return self._forward_streaming(x, mb, hid)
        if self._weights_single_buffered:
            try:
                return self._forward_resident(x, mb, hid, single_buffer=True)
            except Exception:
                # pipeline_mode=pl.Buffered(1) not available in this jax build;
                # fall back to default double-buffered constant-index specs.
                self._weights_single_buffered = False
        return self._forward_resident(x, mb, hid, single_buffer=False)

    def _forward_resident(self, x, mb, hid, single_buffer):
        L = self.n_layers
        batch = x.shape[0]
        wb_kw = dict(pipeline_mode=pl.Buffered(1)) if single_buffer else {}
        flops = 2 * batch * hid * hid * L
        # Weights counted once: constant-index BlockSpec -> no re-DMA per chunk.
        bytes_accessed = 2 * batch * hid * 4 + self._param_bytes
        return pl.pallas_call(
            _pipe_resident_kernel,
            out_shape=jax.ShapeDtypeStruct((batch, hid), x.dtype),
            grid=(self.chunks,),
            in_specs=[
                # micro-batch tile marches over the batch dim
                pl.BlockSpec((mb, hid), lambda i: (i, 0)),
                # params: constant block index -> VMEM-resident (single-buffered)
                pl.BlockSpec((L, hid, hid), lambda i: (0, 0, 0), **wb_kw),
                pl.BlockSpec((L, 1, hid), lambda i: (0, 0, 0), **wb_kw),
            ],
            out_specs=pl.BlockSpec((mb, hid), lambda i: (i, 0)),
            compiler_params=pltpu.CompilerParams(
                # micro-batches are independent; each TC gets a >=128-row tile
                dimension_semantics=("parallel",),
                vmem_limit_bytes=self._vmem_limit_bytes(mb, hid, resident=True),
            ),
            cost_estimate=pl.CostEstimate(
                flops=flops, transcendentals=0, bytes_accessed=bytes_accessed),
        )(x, self.w_all, self.b_all)

    def _forward_streaming(self, x, mb, hid):
        L = self.n_layers
        batch = x.shape[0]
        flops = 2 * batch * hid * hid * L
        # Streamed weights are re-fetched once per chunk.
        bytes_accessed = 2 * batch * hid * 4 + self.chunks * self._param_bytes
        return pl.pallas_call(
            _pipe_streaming_kernel,
            out_shape=jax.ShapeDtypeStruct((batch, hid), x.dtype),
            grid=(self.chunks, L),
            in_specs=[
                pl.BlockSpec((mb, hid), lambda i, l: (i, 0)),
                pl.BlockSpec((1, hid, hid), lambda i, l: (l, 0, 0)),
                pl.BlockSpec((1, 1, hid), lambda i, l: (l, 0, 0)),
            ],
            out_specs=pl.BlockSpec((mb, hid), lambda i, l: (i, 0)),
            scratch_shapes=[pltpu.VMEM((mb, hid), jnp.bfloat16)],
            compiler_params=pltpu.CompilerParams(
                dimension_semantics=("parallel", "arbitrary"),
                vmem_limit_bytes=self._vmem_limit_bytes(mb, hid, resident=False),
            ),
            cost_estimate=pl.CostEstimate(
                flops=flops, transcendentals=0, bytes_accessed=bytes_accessed),
        )(x, self.w_all, self.b_all)


def _ref_forward(x, w_all_bf16, b_all):
    """Pure-JAX reference with the identical bf16-carry / f32-accumulate recipe."""
    h = x.astype(jnp.bfloat16)
    for l in range(w_all_bf16.shape[0]):
        y = jnp.dot(h, w_all_bf16[l], preferred_element_type=jnp.float32)
        y = jnp.maximum(y + b_all[l, 0], 0.0)
        h = y.astype(jnp.bfloat16)
    return h.astype(x.dtype)


if __name__ == "__main__":
    BATCH, HIDDEN = 256, 128  # mb = 128 rows/step (>=128, bf16-sublane aligned), H = 128 lanes
    N_LINEAR = 4              # Sequential = 4 x (Linear(H,H), ReLU) -> 8 torch modules
    WORLD_SIZE = 2            # 2 Linear+ReLU pairs per simulated rank
    CHUNKS = 2                # micro-batches of 128 rows

    key = jax.random.PRNGKey(0)
    kx, kw, kb = jax.random.split(key, 3)
    x = jax.random.normal(kx, (BATCH, HIDDEN), dtype=jnp.float32)
    # Deterministic synthetic parameters (nn.Linear(H, H) pre-transposed to [in, out]).
    w_all = 0.1 * jax.random.normal(kw, (N_LINEAR, HIDDEN, HIDDEN), dtype=jnp.float32)
    b_all = 0.1 * jax.random.normal(kb, (N_LINEAR, 1, HIDDEN), dtype=jnp.float32)

    pipe = PallasPipe(w_all, b_all, shape=(BATCH, HIDDEN),
                      chunks=CHUNKS, world_size=WORLD_SIZE)
    out = jax.block_until_ready(pipe.forward(x))
    ref = jax.block_until_ready(_ref_forward(x, pipe.w_all, pipe.b_all))
    assert out.shape == (BATCH, HIDDEN)
    assert jnp.allclose(out, ref, atol=1e-2, rtol=1e-2), "resident path mismatch"

    # Also exercise the scalable layer-streaming layout (used automatically
    # when L*H^2 no longer fits the resident VMEM budget, e.g. v7x 64 MiB/TC).
    pipe_stream = PallasPipe(w_all, b_all, shape=(BATCH, HIDDEN),
                             chunks=CHUNKS, world_size=WORLD_SIZE,
                             layer_streaming=True)
    out_s = jax.block_until_ready(pipe_stream.forward(x))
    assert jnp.allclose(out_s, ref, atol=1e-2, rtol=1e-2), "streaming path mismatch"

    print("KERNEL_OK")
</pallas_src>

<mosaic_0001>
module attributes {stable_mosaic.version = 11 : i64} {
  func.func @_pipe_resident_kernel(%arg0: i32, %arg1: memref<128x128xf32, #tpu.memory_space<vmem>>, %arg2: memref<4x128x128xbf16, #tpu.memory_space<vmem>>, %arg3: memref<4x1x128xf32, #tpu.memory_space<vmem>>, %arg4: memref<128x128xf32, #tpu.memory_space<vmem>>) attributes {dimension_semantics = [#tpu.dimension_semantics<parallel>], iteration_bounds = array<i64: 2>, scalar_prefetch = 0 : i64, scratch_operands = 0 : i64, tpu.core_type = #tpu.core_type<tc>, window_params = [{transform_indices = @transform_0, window_bounds = array<i64: 128, 128>}, {pipeline_mode = #tpu.pipeline_mode<synchronous>, transform_indices = @transform_1, window_bounds = array<i64: 4, 128, 128>}, {pipeline_mode = #tpu.pipeline_mode<synchronous>, transform_indices = @transform_2, window_bounds = array<i64: 4, 1, 128>}, {transform_indices = @transform_3, window_bounds = array<i64: 128, 128>}]} {
    %c0 = arith.constant 0 : index
    %c0_0 = arith.constant 0 : index
    %0 = vector.load %arg1[%c0, %c0_0] : memref<128x128xf32, #tpu.memory_space<vmem>>, vector<128x128xf32>
    %1 = arith.truncf %0 : vector<128x128xf32> to vector<128x128xbf16>
    %c0_i32 = arith.constant 0 : i32
    %2 = arith.index_cast %c0_i32 : i32 to index
    %c0_1 = arith.constant 0 : index
    %c0_2 = arith.constant 0 : index
    %3 = vector.load %arg2[%2, %c0_1, %c0_2] : memref<4x128x128xbf16, #tpu.memory_space<vmem>>, vector<1x128x128xbf16>
    %4 = vector.shape_cast %3 : vector<1x128x128xbf16> to vector<128x128xbf16>
    %cst = arith.constant dense<0.000000e+00> : vector<128x128xf32>
    %5 = tpu.matmul %1, %4, %cst {dimension_numbers = #tpu.dot_dimension_numbers<[1], [0], [0], [1], [0, 0, 1, 1], [], []>} : vector<128x128xbf16>, vector<128x128xbf16>, vector<128x128xf32> -> vector<128x128xf32>
    %6 = arith.index_cast %c0_i32 : i32 to index
    %c0_3 = arith.constant 0 : index
    %c0_4 = arith.constant 0 : index
    %7 = vector.load %arg3[%6, %c0_3, %c0_4] : memref<4x1x128xf32, #tpu.memory_space<vmem>>, vector<1x1x128xf32>
    %8 = vector.shape_cast %7 : vector<1x1x128xf32> to vector<1x128xf32>
    %9 = vector.broadcast %8 : vector<1x128xf32> to vector<128x128xf32>
    %10 = arith.addf %5, %9 : vector<128x128xf32>
    %cst_5 = arith.constant 0.000000e+00 : f32
    %11 = vector.broadcast %cst_5 : f32 to vector<128x128xf32>
    %12 = arith.maximumf %10, %11 : vector<128x128xf32>
    %13 = arith.truncf %12 : vector<128x128xf32> to vector<128x128xbf16>
    %c1_i32 = arith.constant 1 : i32
    %14 = arith.index_cast %c1_i32 : i32 to index
    %c0_6 = arith.constant 0 : index
    %c0_7 = arith.constant 0 : index
    %15 = vector.load %arg2[%14, %c0_6, %c0_7] : memref<4x128x128xbf16, #tpu.memory_space<vmem>>, vector<1x128x128xbf16>
    %16 = vector.shape_cast %15 : vector<1x128x128xbf16> to vector<128x128xbf16>
    %cst_8 = arith.constant dense<0.000000e+00> : vector<128x128xf32>
    %17 = tpu.matmul %13, %16, %cst_8 {dimension_numbers = #tpu.dot_dimension_numbers<[1], [0], [0], [1], [0, 0, 1, 1], [], []>} : vector<128x128xbf16>, vector<128x128xbf16>, vector<128x128xf32> -> vector<128x128xf32>
    %18 = arith.index_cast %c1_i32 : i32 to index
    %c0_9 = arith.constant 0 : index
    %c0_10 = arith.constant 0 : index
    %19 = vector.load %arg3[%18, %c0_9, %c0_10] : memref<4x1x128xf32, #tpu.memory_space<vmem>>, vector<1x1x128xf32>
    %20 = vector.shape_cast %19 : vector<1x1x128xf32> to vector<1x128xf32>
    %21 = vector.broadcast %20 : vector<1x128xf32> to vector<128x128xf32>
    %22 = arith.addf %17, %21 : vector<128x128xf32>
    %cst_11 = arith.constant 0.000000e+00 : f32
    %23 = vector.broadcast %cst_11 : f32 to vector<128x128xf32>
    %24 = arith.maximumf %22, %23 : vector<128x128xf32>
    %25 = arith.truncf %24 : vector<128x128xf32> to vector<128x128xbf16>
    %c2_i32 = arith.constant 2 : i32
    %26 = arith.index_cast %c2_i32 : i32 to index
    %c0_12 = arith.constant 0 : index
    %c0_13 = arith.constant 0 : index
    %27 = vector.load %arg2[%26, %c0_12, %c0_13] : memref<4x128x128xbf16, #tpu.memory_space<vmem>>, vector<1x128x128xbf16>
    %28 = vector.shape_cast %27 : vector<1x128x128xbf16> to vector<128x128xbf16>
    %cst_14 = arith.constant dense<0.000000e+00> : vector<128x128xf32>
    %29 = tpu.matmul %25, %28, %cst_14 {dimension_numbers = #tpu.dot_dimension_numbers<[1], [0], [0], [1], [0, 0, 1, 1], [], []>} : vector<128x128xbf16>, vector<128x128xbf16>, vector<128x128xf32> -> vector<128x128xf32>
    %30 = arith.index_cast %c2_i32 : i32 to index
    %c0_15 = arith.constant 0 : index
    %c0_16 = arith.constant 0 : index
    %31 = vector.load %arg3[%30, %c0_15, %c0_16] : memref<4x1x128xf32, #tpu.memory_space<vmem>>, vector<1x1x128xf32>
    %32 = vector.shape_cast %31 : vector<1x1x128xf32> to vector<1x128xf32>
    %33 = vector.broadcast %32 : vector<1x128xf32> to vector<128x128xf32>
    %34 = arith.addf %29, %33 : vector<128x128xf32>
    %cst_17 = arith.constant 0.000000e+00 : f32
    %35 = vector.broadcast %cst_17 : f32 to vector<128x128xf32>
    %36 = arith.maximumf %34, %35 : vector<128x128xf32>
    %37 = arith.truncf %36 : vector<128x128xf32> to vector<128x128xbf16>
    %c3_i32 = arith.constant 3 : i32
    %38 = arith.index_cast %c3_i32 : i32 to index
    %c0_18 = arith.constant 0 : index
    %c0_19 = arith.constant 0 : index
    %39 = vector.load %arg2[%38, %c0_18, %c0_19] : memref<4x128x128xbf16, #tpu.memory_space<vmem>>, vector<1x128x128xbf16>
    %40 = vector.shape_cast %39 : vector<1x128x128xbf16> to vector<128x128xbf16>
    %cst_20 = arith.constant dense<0.000000e+00> : vector<128x128xf32>
    %41 = tpu.matmul %37, %40, %cst_20 {dimension_numbers = #tpu.dot_dimension_numbers<[1], [0], [0], [1], [0, 0, 1, 1], [], []>} : vector<128x128xbf16>, vector<128x128xbf16>, vector<128x128xf32> -> vector<128x128xf32>
    %42 = arith.index_cast %c3_i32 : i32 to index
    %c0_21 = arith.constant 0 : index
    %c0_22 = arith.constant 0 : index
    %43 = vector.load %arg3[%42, %c0_21, %c0_22] : memref<4x1x128xf32, #tpu.memory_space<vmem>>, vector<1x1x128xf32>
    %44 = vector.shape_cast %43 : vector<1x1x128xf32> to vector<1x128xf32>
    %45 = vector.broadcast %44 : vector<1x128xf32> to vector<128x128xf32>
    %46 = arith.addf %41, %45 : vector<128x128xf32>
    %cst_23 = arith.constant 0.000000e+00 : f32
    %47 = vector.broadcast %cst_23 : f32 to vector<128x128xf32>
    %48 = arith.maximumf %46, %47 : vector<128x128xf32>
    %49 = arith.truncf %48 : vector<128x128xf32> to vector<128x128xbf16>
    %c4_i32 = arith.constant 4 : i32
    %50 = arith.extf %49 : vector<128x128xbf16> to vector<128x128xf32>
    %c0_24 = arith.constant 0 : index
    %c0_25 = arith.constant 0 : index
    %51 = vector.load %arg4[%c0_24, %c0_25] : memref<128x128xf32, #tpu.memory_space<vmem>>, vector<128x128xf32>
    tpu.vector_store %arg4[%c0_24, %c0_25], %50 {strides = array<i32>} : memref<128x128xf32, #tpu.memory_space<vmem>>, vector<128x128xf32>,
    return
  }
  func.func @transform_0(%arg0: i32) -> (i32, i32) {
    %c0_i32 = arith.constant 0 : i32
    %c0_i32_0 = arith.constant 0 : i32
    return %arg0, %c0_i32 : i32, i32
  }
  func.func @transform_1(%arg0: i32) -> (i32, i32, i32) {
    %c0_i32 = arith.constant 0 : i32
    %c0_i32_0 = arith.constant 0 : i32
    %c0_i32_1 = arith.constant 0 : i32
    %c0_i32_2 = arith.constant 0 : i32
    return %c0_i32, %c0_i32_0, %c0_i32_1 : i32, i32, i32
  }
  func.func @transform_2(%arg0: i32) -> (i32, i32, i32) {
    %c0_i32 = arith.constant 0 : i32
    %c0_i32_0 = arith.constant 0 : i32
    %c0_i32_1 = arith.constant 0 : i32
    %c0_i32_2 = arith.constant 0 : i32
    return %c0_i32, %c0_i32_0, %c0_i32_1 : i32, i32, i32
  }
  func.func @transform_3(%arg0: i32) -> (i32, i32) {
    %c0_i32 = arith.constant 0 : i32
    %c0_i32_0 = arith.constant 0 : i32
    return %arg0, %c0_i32 : i32, i32
  }
}

module attributes {stable_mosaic.version = 11 : i64} {
  func.func @_pipe_resident_kernel(%arg0: i32, %arg1: memref<128x128xf32, #tpu.memory_space<vmem>>, %arg2: memref<4x128x128xbf16, #tpu.memory_space<vmem>>, %arg3: memref<4x1x128xf32, #tpu.memory_space<vmem>>, %arg4: memref<128x128xf32, #tpu.memory_space<vmem>>) attributes {dimension_semantics = [#tpu.dimension_semantics<parallel>], iteration_bounds = array<i64: 2>, scalar_prefetch = 0 : i64, scratch_operands = 0 : i64, tpu.core_type = #tpu.core_type<tc>, window_params = [{transform_indices = @transform_0, window_bounds = array<i64: 128, 128>}, {pipeline_mode = #tpu.pipeline_mode<synchronous>, transform_indices = @transform_1, window_bounds = array<i64: 4, 128, 128>}, {pipeline_mode = #tpu.pipeline_mode<synchronous>, transform_indices = @transform_2, window_bounds = array<i64: 4, 1, 128>}, {transform_indices = @transform_3, window_bounds = array<i64: 128, 128>}]} {
    %c0 = arith.constant 0 : index
    %c0_0 = arith.constant 0 : index
    %0 = vector.load %arg1[%c0, %c0_0] : memref<128x128xf32, #tpu.memory_space<vmem>>, vector<128x128xf32>
    %1 = arith.truncf %0 : vector<128x128xf32> to vector<128x128xbf16>
    %c0_i32 = arith.constant 0 : i32
    %2 = arith.index_cast %c0_i32 : i32 to index
    %c0_1 = arith.constant 0 : index
    %c0_2 = arith.constant 0 : index
    %3 = vector.load %arg2[%2, %c0_1, %c0_2] : memref<4x128x128xbf16, #tpu.memory_space<vmem>>, vector<1x128x128xbf16>
    %4 = vector.shape_cast %3 : vector<1x128x128xbf16> to vector<128x128xbf16>
    %cst = arith.constant dense<0.000000e+00> : vector<128x128xf32>
    %5 = tpu.matmul %1, %4, %cst {dimension_numbers = #tpu.dot_dimension_numbers<[1], [0], [0], [1], [0, 0, 1, 1], [], []>} : vector<128x128xbf16>, vector<128x128xbf16>, vector<128x128xf32> -> vector<128x128xf32>
    %6 = arith.index_cast %c0_i32 : i32 to index
    %c0_3 = arith.constant 0 : index
    %c0_4 = arith.constant 0 : index
    %7 = vector.load %arg3[%6, %c0_3, %c0_4] : memref<4x1x128xf32, #tpu.memory_space<vmem>>, vector<1x1x128xf32>
    %8 = vector.shape_cast %7 : vector<1x1x128xf32> to vector<1x128xf32>
    %9 = vector.broadcast %8 : vector<1x128xf32> to vector<128x128xf32>
    %10 = arith.addf %5, %9 : vector<128x128xf32>
    %cst_5 = arith.constant 0.000000e+00 : f32
    %11 = vector.broadcast %cst_5 : f32 to vector<128x128xf32>
    %12 = arith.maximumf %10, %11 : vector<128x128xf32>
    %13 = arith.truncf %12 : vector<128x128xf32> to vector<128x128xbf16>
    %c1_i32 = arith.constant 1 : i32
    %14 = arith.index_cast %c1_i32 : i32 to index
    %c0_6 = arith.constant 0 : index
    %c0_7 = arith.constant 0 : index
    %15 = vector.load %arg2[%14, %c0_6, %c0_7] : memref<4x128x128xbf16, #tpu.memory_space<vmem>>, vector<1x128x128xbf16>
    %16 = vector.shape_cast %15 : vector<1x128x128xbf16> to vector<128x128xbf16>
    %cst_8 = arith.constant dense<0.000000e+00> : vector<128x128xf32>
    %17 = tpu.matmul %13, %16, %cst_8 {dimension_numbers = #tpu.dot_dimension_numbers<[1], [0], [0], [1], [0, 0, 1, 1], [], []>} : vector<128x128xbf16>, vector<128x128xbf16>, vector<128x128xf32> -> vector<128x128xf32>
    %18 = arith.index_cast %c1_i32 : i32 to index
    %c0_9 = arith.constant 0 : index
    %c0_10 = arith.constant 0 : index
    %19 = vector.load %arg3[%18, %c0_9, %c0_10] : memref<4x1x128xf32, #tpu.memory_space<vmem>>, vector<1x1x128xf32>
    %20 = vector.shape_cast %19 : vector<1x1x128xf32> to vector<1x128xf32>
    %21 = vector.broadcast %20 : vector<1x128xf32> to vector<128x128xf32>
    %22 = arith.addf %17, %21 : vector<128x128xf32>
    %cst_11 = arith.constant 0.000000e+00 : f32
    %23 = vector.broadcast %cst_11 : f32 to vector<128x128xf32>
    %24 = arith.maximumf %22, %23 : vector<128x128xf32>
    %25 = arith.truncf %24 : vector<128x128xf32> to vector<128x128xbf16>
    %c2_i32 = arith.constant 2 : i32
    %26 = arith.index_cast %c2_i32 : i32 to index
    %c0_12 = arith.constant 0 : index
    %c0_13 = arith.constant 0 : index
    %27 = vector.load %arg2[%26, %c0_12, %c0_13] : memref<4x128x128xbf16, #tpu.memory_space<vmem>>, vector<1x128x128xbf16>
    %28 = vector.shape_cast %27 : vector<1x128x128xbf16> to vector<128x128xbf16>
    %cst_14 = arith.constant dense<0.000000e+00> : vector<128x128xf32>
    %29 = tpu.matmul %25, %28, %cst_14 {dimension_numbers = #tpu.dot_dimension_numbers<[1], [0], [0], [1], [0, 0, 1, 1], [], []>} : vector<128x128xbf16>, vector<128x128xbf16>, vector<128x128xf32> -> vector<128x128xf32>
    %30 = arith.index_cast %c2_i32 : i32 to index
    %c0_15 = arith.constant 0 : index
    %c0_16 = arith.constant 0 : index
    %31 = vector.load %arg3[%30, %c0_15, %c0_16] : memref<4x1x128xf32, #tpu.memory_space<vmem>>, vector<1x1x128xf32>
    %32 = vector.shape_cast %31 : vector<1x1x128xf32> to vector<1x128xf32>
    %33 = vector.broadcast %32 : vector<1x128xf32> to vector<128x128xf32>
    %34 = arith.addf %29, %33 : vector<128x128xf32>
    %cst_17 = arith.constant 0.000000e+00 : f32
    %35 = vector.broadcast %cst_17 : f32 to vector<128x128xf32>
    %36 = arith.maximumf %34, %35 : vector<128x128xf32>
    %37 = arith.truncf %36 : vector<128x128xf32> to vector<128x128xbf16>
    %c3_i32 = arith.constant 3 : i32
    %38 = arith.index_cast %c3_i32 : i32 to index
    %c0_18 = arith.constant 0 : index
    %c0_19 = arith.constant 0 : index
    %39 = vector.load %arg2[%38, %c0_18, %c0_19] : memref<4x128x128xbf16, #tpu.memory_space<vmem>>, vector<1x128x128xbf16>
    %40 = vector.shape_cast %39 : vector<1x128x128xbf16> to vector<128x128xbf16>
    %cst_20 = arith.constant dense<0.000000e+00> : vector<128x128xf32>
    %41 = tpu.matmul %37, %40, %cst_20 {dimension_numbers = #tpu.dot_dimension_numbers<[1], [0], [0], [1], [0, 0, 1, 1], [], []>} : vector<128x128xbf16>, vector<128x128xbf16>, vector<128x128xf32> -> vector<128x128xf32>
    %42 = arith.index_cast %c3_i32 : i32 to index
    %c0_21 = arith.constant 0 : index
    %c0_22 = arith.constant 0 : index
    %43 = vector.load %arg3[%42, %c0_21, %c0_22] : memref<4x1x128xf32, #tpu.memory_space<vmem>>, vector<1x1x128xf32>
    %44 = vector.shape_cast %43 : vector<1x1x128xf32> to vector<1x128xf32>
    %45 = vector.broadcast %44 : vector<1x128xf32> to vector<128x128xf32>
    %46 = arith.addf %41, %45 : vector<128x128xf32>
    %cst_23 = arith.constant 0.000000e+00 : f32
    %47 = vector.broadcast %cst_23 : f32 to vector<128x128xf32>
    %48 = arith.maximumf %46, %47 : vector<128x128xf32>
    %49 = arith.truncf %48 : vector<128x128xf32> to vector<128x128xbf16>
    %c4_i32 = arith.constant 4 : i32
    %50 = arith.extf %49 : vector<128x128xbf16> to vector<128x128xf32>
    %c0_24 = arith.constant 0 : index
    %c0_25 = arith.constant 0 : index
    %51 = vector.load %arg4[%c0_24, %c0_25] : memref<128x128xf32, #tpu.memory_space<vmem>>, vector<128x128xf32>
    tpu.vector_store %arg4[%c0_24, %c0_25], %50 {strides = array<i32>} : memref<128x128xf32, #tpu.memory_space<vmem>>, vector<128x128xf32>,
    return
  }
  func.func @transform_0(%arg0: i32) -> (i32, i32) {
    %c0_i32 = arith.constant 0 : i32
    %c0_i32_0 = arith.constant 0 : i32
    return %arg0, %c0_i32 : i32, i32
  }
  func.func @transform_1(%arg0: i32) -> (i32, i32, i32) {
    %c0_i32 = arith.constant 0 : i32
    %c0_i32_0 = arith.constant 0 : i32
    %c0_i32_1 = arith.constant 0 : i32
    %c0_i32_2 = arith.constant 0 : i32
    return %c0_i32, %c0_i32_0, %c0_i32_1 : i32, i32, i32
  }
  func.func @transform_2(%arg0: i32) -> (i32, i32, i32) {
    %c0_i32 = arith.constant 0 : i32
    %c0_i32_0 = arith.constant 0 : i32
    %c0_i32_1 = arith.constant 0 : i32
    %c0_i32_2 = arith.constant 0 : i32
    return %c0_i32, %c0_i32_0, %c0_i32_1 : i32, i32, i32
  }
  func.func @transform_3(%arg0: i32) -> (i32, i32) {
    %c0_i32 = arith.constant 0 : i32
    %c0_i32_0 = arith.constant 0 : i32
    return %arg0, %c0_i32 : i32, i32
  }
}

</mosaic_0001>

<llo_original>
// kernel: tpu_custom_call.1
$region0: #{tpu_custom_call.1}
  #allocation0 [shape = 'u32[]', space=smem, size = 0x4, offset = 0x4, fixed_abs, tag = 'smem constant byte address 0x4 - core index']
  #allocation1 [shape = 'u32[144,128]{1,0:T(1,128)}', space=vmem, size = 0x12000, scoped, tag = 'internal scratch']
  %s0 = inlined_call_operand.hbm [shape: f32[256,128], index: 0, kind: input, shape index: {}]
  %s1 = inlined_call_operand.hbm [shape: bf16[4,128,128], index: 1, kind: input, shape index: {}]
  %s2 = inlined_call_operand.hbm [shape: f32[4,1,128], index: 2, kind: input, shape index: {}]
  %s3 = inlined_call_operand.hbm [shape: f32[256,128], index: 3, kind: output, shape index: {}]
  %s4 = sld [smem:[#allocation0]]
  $region57: #{tpu_custom_call.1} parent=0
    _
  %s6 = ssub.s32 1, %s4
  %s7 = scalar_select 0, %s6, %s4
  $region1: #{tpu_custom_call.1} parent=0
    #allocation2 [shape = 'u8[131072]{0}', space=vmem, size = 0x20000, scoped, tag = 'input window, operand 0']
    #allocation3 [shape = 's32[2]{0}', space=sflag, size = 0x8, scoped, tag = 'scoped memory for tpu_custom_call.1']
    #allocation4 [shape = 's32[2]{0}', space=sflag, size = 0x8, scoped, tag = 'scoped memory for tpu_custom_call.1']
    #allocation5 [shape = 'u8[131072]{0}', space=vmem, size = 0x20000, scoped, tag = 'input window, operand 1, single buffered']
    #allocation6 [shape = 's32[1]{0}', space=sflag, size = 0x4, scoped, tag = 'scoped memory for tpu_custom_call.1']
    #allocation7 [shape = 'u8[2048]{0}', space=vmem, size = 0x800, scoped, tag = 'input window, operand 2, single buffered']
    #allocation8 [shape = 'u8[131072]{0}', space=vmem, size = 0x20000, scoped, tag = 'output window, operand 0']
    %8 = vsyncpa [#allocation3], 0
    %s9 = scalar_lea.sflag [#allocation3], 1
    %10 = vsyncpa %s9, 0
    %11 = vsyncpa [#allocation6], 0
    %12 = vsyncpa [#allocation4], 0
    %s13 = scalar_lea.sflag [#allocation4], 1
    %14 = vsyncpa %s13, 0
    loop: start=0, step=1, limit=4
    $region2: #{tpu_custom_call.1} parent=1 // loop_pre_header
      _
    $region3: #{tpu_custom_call.1} parent=1 // loop_header
      %s16 = sphi 0, %s20
      %p17 = scmp.ge.s32.totalorder %s16, 4
      %s26 = sphi 0, %s28
      %s29 = sphi 0, %s26
      %s30 = sphi 0, %s29
      %s46 = sphi 0, %s30
      %s50 = sphi 0, %s50
      %s52 = sphi 0, %s50
      %s53 = sphi 0, %s52
      %s67 = sphi 0, %s53
      %s71 = sphi 0, %s71
      %s73 = sphi 0, %s71
      %s74 = sphi 0, %s73
      %s88 = sphi 0, %s74
      %s94 = sphi 0, %s96
      %s97 = sphi 0, %s94
      %s98 = sphi 0, %s97
      %s114 = sphi 0, %s98
    $region4: #{tpu_custom_call.1} parent=1 // loop_header_branch
      %19 = sbr.rel (%p17) target = $region8
    $region5: #{tpu_custom_call.1} parent=1 // loop_body
      %s21 = ssub.s32 %s16, 1
      %s22 = ssub.s32 %s16, 2
      %s23 = sadd.s32 %s16, 1
      %s24 = ssub.s32 %s16, %s23
      %p25 = scmp.eq.s32.totalorder %s24, 0
      %s27 = sadd.s32 %s26, 1
      %s28 = scalar_select %p25, %s26, %s27
      %p31 = pneg %p25
      %p32 = scmp.eq.s32.totalorder %s16, 1
      %p33 = por %p31, %p32
      %p34 = scmp.ne.s32.totalorder %s26, %s29
      %p35 = scmp.eq.s32.totalorder %s16, 0
      %p36 = por %p34, %p35
      %p37 = scmp.ne.s32.totalorder %s26, %s29
      %p38 = scmp.eq.s32.totalorder %s21, 1
      %p39 = por %p37, %p38
      %p40 = scmp.ne.s32.totalorder %s29, %s30
      %p41 = scmp.eq.s32.totalorder %s21, 0
      %p42 = por %p40, %p41
      %p43 = scmp.ne.s32.totalorder %s29, %s30
      %p44 = scmp.eq.s32.totalorder %s22, 1
      %p45 = por %p43, %p44
      %p47 = scmp.ne.s32.totalorder %s30, %s46
      %p48 = scmp.eq.s32.totalorder %s22, 0
      %p49 = por %p47, %p48
      %s51 = sadd.s32 %s50, 1
      %p54 = scmp.eq.s32.totalorder %s16, 1
      %p55 = scmp.ne.s32.totalorder %s50, %s52
      %p56 = scmp.eq.s32.totalorder %s16, 0
      %p57 = por %p55, %p56
      %p58 = scmp.ne.s32.totalorder %s50, %s52
      %p59 = scmp.eq.s32.totalorder %s21, 1
      %p60 = por %p58, %p59
      %p61 = scmp.ne.s32.totalorder %s52, %s53
      %p62 = scmp.eq.s32.totalorder %s21, 0
      %p63 = por %p61, %p62
      %p64 = scmp.ne.s32.totalorder %s52, %s53
      %p65 = scmp.eq.s32.totalorder %s22, 1
      %p66 = por %p64, %p65
      %p68 = scmp.ne.s32.totalorder %s53, %s67
      %p69 = scmp.eq.s32.totalorder %s22, 0
      %p70 = por %p68, %p69
      %s72 = sadd.s32 %s71, 1
      %p75 = scmp.eq.s32.totalorder %s16, 1
      %p76 = scmp.ne.s32.totalorder %s71, %s73
      %p77 = scmp.eq.s32.totalorder %s16, 0
      %p78 = por %p76, %p77
      %p79 = scmp.ne.s32.totalorder %s71, %s73
      %p80 = scmp.eq.s32.totalorder %s21, 1
      %p81 = por %p79, %p80
      %p82 = scmp.ne.s32.totalorder %s73, %s74
      %p83 = scmp.eq.s32.totalorder %s21, 0
      %p84 = por %p82, %p83
      %p85 = scmp.ne.s32.totalorder %s73, %s74
      %p86 = scmp.eq.s32.totalorder %s22, 1
      %p87 = por %p85, %p86
      %p89 = scmp.ne.s32.totalorder %s74, %s88
      %p90 = scmp.eq.s32.totalorder %s22, 0
      %p91 = por %p89, %p90
      %s92 = ssub.s32 %s16, %s23
      %p93 = scmp.eq.s32.totalorder %s92, 0
      %s95 = sadd.s32 %s94, 1
      %s96 = scalar_select %p93, %s94, %s95
      %p99 = pneg %p93
      %p100 = scmp.eq.s32.totalorder %s16, 1
      %p101 = por %p99, %p100
      %p102 = scmp.ne.s32.totalorder %s94, %s97
      %p103 = scmp.eq.s32.totalorder %s16, 0
      %p104 = por %p102, %p103
      %p105 = scmp.ne.s32.totalorder %s94, %s97
      %p106 = scmp.eq.s32.totalorder %s21, 1
      %p107 = por %p105, %p106
      %p108 = scmp.ne.s32.totalorder %s97, %s98
      %p109 = scmp.eq.s32.totalorder %s21, 0
      %p110 = por %p108, %p109
      %p111 = scmp.ne.s32.totalorder %s97, %s98
      %p112 = scmp.eq.s32.totalorder %s22, 1
      %p113 = por %p111, %p112
      %p115 = scmp.ne.s32.totalorder %s98, %s114
      %p116 = scmp.eq.s32.totalorder %s22, 0
      %p117 = por %p115, %p116
      %p118 = scmp.le.s32.totalorder 1, %s16
      %p119 = scmp.lt.s32.totalorder %s16, 3
      %p120 = pnand %p118, %p119
      %p121 = pneg %p120
      // Predicated region
      $region9: #{tpu_custom_call.1} parent=5 // pred_check
        _
      $region10: #{tpu_custom_call.1} parent=5 // pred_check_branch
        %123 = sbr.rel (%p120) target = $region12
      $region11: #{tpu_custom_call.1} parent=5 // pred_region
        %s124 = ssub.s32 %s16, 1
        // Predicated region
        $region13: #{tpu_custom_call.1} parent=11 // pred_check
          %p125 = pneg %p63
        $region14: #{tpu_custom_call.1} parent=11 // pred_check_branch
          %127 = sbr.rel (%p125) target = $region16
        $region15: #{tpu_custom_call.1} parent=11 // pred_region
          %s129 = ssub.s32 4096, 4096
          %130 = vsyncadd [#allocation6], %s129
          %s131 = sshll.u32 [#allocation5], 4
          %s132 = int_to_ptr.vmem [resolvable:$true] %s131
          %137 = dma.hbm_to_vmem [thread:$0]  %s1, 4096, %s132, [#allocation6], 64, 64, 4
        $region16: #{tpu_custom_call.1} parent=11 // pred_fallthru
          _
        // Predicated region
        $region17: #{tpu_custom_call.1} parent=11 // pred_check
          %p138 = pneg %p84
        $region18: #{tpu_custom_call.1} parent=11 // pred_check_branch
          %140 = sbr.rel (%p138) target = $region20
        $region19: #{tpu_custom_call.1} parent=11 // pred_region
          %s142 = ssub.s32 64, 64
          %143 = vsyncadd [#allocation6], %s142
          %s144 = sshll.u32 [#allocation7], 4
          %s145 = int_to_ptr.vmem [resolvable:$true] %s144
          %150 = dma.hbm_to_vmem [thread:$0]  %s2, 64, %s145, [#allocation6], 16, 16, 1
        $region20: #{tpu_custom_call.1} parent=11 // pred_fallthru
          _
      $region12: #{tpu_custom_call.1} parent=5 // pred_fallthru
        _
      %p151 = scmp.lt.s32.totalorder %s16, 2
      // Predicated region
      $region21: #{tpu_custom_call.1} parent=5 // pred_check
        %p152 = pneg %p151
      $region22: #{tpu_custom_call.1} parent=5 // pred_check_branch
        %154 = sbr.rel (%p152) target = $region24
      $region23: #{tpu_custom_call.1} parent=5 // pred_region
        // Predicated region
        $region25: #{tpu_custom_call.1} parent=23 // pred_check
          %p155 = pneg %p36
        $region26: #{tpu_custom_call.1} parent=23 // pred_check_branch
          %157 = sbr.rel (%p155) target = $region28
        $region27: #{tpu_custom_call.1} parent=23 // pred_region
          %s158 = sand.u32 %s26, 1
          %s159 = scalar_lea.sflag [#allocation3], %s158
          %s160 = sand.u32 %s26, 1
          %s161 = smul.addr %s160, 128
          %s162 = scalar_lea.vmem [#allocation2], %s161
          %s163 = smul.u32 16, %s16
          %s165 = ssub.s32 2048, 2048
          %166 = vsyncadd %s159, %s165
          %s167 = smul.addr %s163, 128
          %s168 = scalar_lea.hbm %s0, %s167
          %s169 = sshll.u32 %s162, 4
          %s170 = int_to_ptr.vmem [resolvable:$true] %s169
          %175 = dma.hbm_to_vmem [thread:$0]  %s168, 2048, %s170, %s159, 128, 128, 8
        $region28: #{tpu_custom_call.1} parent=23 // pred_fallthru
          _
      $region24: #{tpu_custom_call.1} parent=5 // pred_fallthru
        _
      %p176 = scmp.le.s32.totalorder 1, %s16
      %p177 = scmp.lt.s32.totalorder %s16, 3
      %p178 = pnand %p176, %p177
      %p179 = pneg %p178
      // Predicated region
      $region29: #{tpu_custom_call.1} parent=5 // pred_check
        _
      $region30: #{tpu_custom_call.1} parent=5 // pred_check_branch
        %181 = sbr.rel (%p178) target = $region32
      $region31: #{tpu_custom_call.1} parent=5 // pred_region
        %s182 = ssub.s32 %s16, 1
        %s183 = sand.u32 %s29, 1
        %s184 = scalar_lea.sflag [#allocation3], %s183
        %s185 = sand.u32 %s29, 1
        %s186 = smul.addr %s185, 128
        %s187 = scalar_lea.vmem [#allocation2], %s186
        // Predicated region
        $region33: #{tpu_custom_call.1} parent=31 // pred_check
          %p188 = pneg %p42
        $region34: #{tpu_custom_call.1} parent=31 // pred_check_branch
          %190 = sbr.rel (%p188) target = $region36
        $region35: #{tpu_custom_call.1} parent=31 // pred_region
          %191 = dma.done %s184, 2048
        $region36: #{tpu_custom_call.1} parent=31 // pred_fallthru
          _
        // Predicated region
        $region37: #{tpu_custom_call.1} parent=31 // pred_check
          %p192 = pneg %p63
        $region38: #{tpu_custom_call.1} parent=31 // pred_check_branch
          %194 = sbr.rel (%p192) target = $region40
        $region39: #{tpu_custom_call.1} parent=31 // pred_region
          %195 = dma.done [#allocation6], 4096
        $region40: #{tpu_custom_call.1} parent=31 // pred_fallthru
          _
        // Predicated region
        $region41: #{tpu_custom_call.1} parent=31 // pred_check
          %p196 = pneg %p84
        $region42: #{tpu_custom_call.1} parent=31 // pred_check_branch
          %198 = sbr.rel (%p196) target = $region44
        $region43: #{tpu_custom_call.1} parent=31 // pred_region
          %199 = dma.done [#allocation6], 64
        $region44: #{tpu_custom_call.1} parent=31 // pred_fallthru
          _
        %s200 = sand.u32 %s29, 1
        %s201 = scalar_lea.sflag [#allocation3], %s200
        %s202 = sand.u32 %s29, 1
        %s203 = smul.addr %s202, 128
        %s204 = scalar_lea.vmem [#allocation2], %s203
        %p205 = pneg %p42
        %p206 = pneg %p39
        %p207 = pneg %p63
        %p208 = pneg %p60
        %p209 = pneg %p84
        %p210 = pneg %p81
        %p211 = pneg %p110
        %p212 = pneg %p107
        %s213 = sand.u32 %s97, 1
        %s214 = scalar_lea.sflag [#allocation4], %s213
        %s215 = sand.u32 %s97, 1
        %s216 = smul.addr %s215, 128
        %s217 = scalar_lea.vmem [#allocation8], %s216
        %s218 = smul.u32 16, %s21
        %s219 = smul.u32 16, %s21
        %v221 = vld [vmem:[%s187] sm:$0xff]
        %v222 = vld [vmem:[%s187 + $0x8] sm:$0xff]
        %v223 = vld [vmem:[%s187 + $0x10] sm:$0xff]
        %v224 = vld [vmem:[%s187 + $0x18] sm:$0xff]
        %v225 = vld [vmem:[%s187 + $0x20] sm:$0xff]
        %v226 = vld [vmem:[%s187 + $0x28] sm:$0xff]
        %v227 = vld [vmem:[%s187 + $0x30] sm:$0xff]
        %v228 = vld [vmem:[%s187 + $0x38] sm:$0xff]
        %v229 = vld [vmem:[%s187 + $0x40] sm:$0xff]
        %v230 = vld [vmem:[%s187 + $0x48] sm:$0xff]
        %v231 = vld [vmem:[%s187 + $0x50] sm:$0xff]
        %v232 = vld [vmem:[%s187 + $0x58] sm:$0xff]
        %v233 = vld [vmem:[%s187 + $0x60] sm:$0xff]
        %v234 = vld [vmem:[%s187 + $0x68] sm:$0xff]
        %v235 = vld [vmem:[%s187 + $0x70] sm:$0xff]
        %v236 = vld [vmem:[%s187 + $0x78] sm:$0xff]
        %v237 = vpack.c.bf16 %v222, %v221
        %v238 = vpack.c.bf16 %v224, %v223
        %v239 = vpack.c.bf16 %v226, %v225
        %v240 = vpack.c.bf16 %v228, %v227
        %v241 = vpack.c.bf16 %v230, %v229
        %v242 = vpack.c.bf16 %v232, %v231
        %v243 = vpack.c.bf16 %v234, %v233
        %v244 = vpack.c.bf16 %v236, %v235
        %v245 = vld [vmem:[#allocation5] sm:$0xf]
        %v246 = vld [vmem:[#allocation5 + $0x4] sm:$0xf]
        %v247 = vld [vmem:[#allocation5 + $0x8] sm:$0xf]
        %v248 = vld [vmem:[#allocation5 + $0xc] sm:$0xf]
        %v249 = vld [vmem:[#allocation5 + $0x10] sm:$0xf]
        %v250 = vld [vmem:[#allocation5 + $0x14] sm:$0xf]
        %v251 = vld [vmem:[#allocation5 + $0x18] sm:$0xf]
        %v252 = vld [vmem:[#allocation5 + $0x1c] sm:$0xf]
        %v253 = vld [vmem:[#allocation5 + $0x20] sm:$0xf]
        %v254 = vld [vmem:[#allocation5 + $0x24] sm:$0xf]
        %v255 = vld [vmem:[#allocation5 + $0x28] sm:$0xf]
        %v256 = vld [vmem:[#allocation5 + $0x2c] sm:$0xf]
        %v257 = vld [vmem:[#allocation5 + $0x30] sm:$0xf]
        %v258 = vld [vmem:[#allocation5 + $0x34] sm:$0xf]
        %v259 = vld [vmem:[#allocation5 + $0x38] sm:$0xf]
        %v260 = vld [vmem:[#allocation5 + $0x3c] sm:$0xf]
        %v261 = vld [vmem:[#allocation7] sm:$0x1]
        %v263 = vlaneseq
        %v264 = vshrl.u32 %v263, 7
        %v265 = vsub.s32 0, %v264
        %v266 = vrot.slane %v261, %v265
        %v284 = vunpack.c.l.b16 %v245
        %v285 = vunpack.c.l.b16 %v246
        %v286 = vunpack.c.l.b16 %v247
        %v287 = vunpack.c.l.b16 %v248
        %v288 = vunpack.c.l.b16 %v249
        %v289 = vunpack.c.l.b16 %v250
        %v290 = vunpack.c.l.b16 %v251
        %v291 = vunpack.c.l.b16 %v252
        %v292 = vunpack.c.l.b16 %v253
        %v293 = vunpack.c.l.b16 %v254
        %v294 = vunpack.c.l.b16 %v255
        %v295 = vunpack.c.l.b16 %v256
        %v296 = vunpack.c.l.b16 %v257
        %v297 = vunpack.c.l.b16 %v258
        %v298 = vunpack.c.l.b16 %v259
        %v299 = vunpack.c.l.b16 %v260
        %v300 = vpack.c.b16 %v285, %v284
        %v301 = vpack.c.b16 %v287, %v286
        %v302 = vpack.c.b16 %v289, %v288
        %v303 = vpack.c.b16 %v291, %v290
        %v304 = vpack.c.b16 %v293, %v292
        %v305 = vpack.c.b16 %v295, %v294
        %v306 = vpack.c.b16 %v297, %v296
        %v307 = vpack.c.b16 %v299, %v298
        %316 = vmatprep.subr.bf16.mxu0 0
        %317 = vmatpush1.bf16.msra.mxu0 %v307
        %318 = vmatprep.subr.bf16.mxu0 0
        %319 = vmatpush1.bf16.msra.mxu0 %v306
        %320 = vmatprep.subr.bf16.mxu0 0
        %321 = vmatpush1.bf16.msra.mxu0 %v305
        %322 = vmatprep.subr.bf16.mxu0 0
        %323 = vmatpush1.bf16.msra.mxu0 %v304
        %324 = vmatprep.subr.bf16.mxu0 0
        %325 = vmatpush1.bf16.msra.mxu0 %v303
        %326 = vmatprep.subr.bf16.mxu0 0
        %327 = vmatpush1.bf16.msra.mxu0 %v302
        %328 = vmatprep.subr.bf16.mxu0 0
        %329 = vmatpush1.bf16.msra.mxu0 %v301
        %330 = vmatprep.subr.bf16.mxu0 0
        %331 = vmatpush1.bf16.msra.mxu0 %v300
        %332 = vmatprep.subr.bf16.mxu0 0
        %333 = vmatpush2.bf16.msra.mxu0 0
        %334 = vmatprep.subr.bf16.mxu0 0
        %335 = vmatpush2.bf16.msra.mxu0 0
        %336 = vmatprep.subr.bf16.mxu0 0
        %337 = vmatpush2.bf16.msra.mxu0 0
        %338 = vmatprep.subr.bf16.mxu0 0
        %339 = vmatpush2.bf16.msra.mxu0 0
        %340 = vmatprep.subr.bf16.mxu0 0
        %341 = vmatpush2.bf16.msra.mxu0 0
        %342 = vmatprep.subr.bf16.mxu0 0
        %343 = vmatpush2.bf16.msra.mxu0 0
        %344 = vmatprep.subr.bf16.mxu0 0
        %345 = vmatpush2.bf16.msra.mxu0 0
        %346 = vmatprep.subr.bf16.mxu0 0
        %347 = vmatpush2.bf16.msra.mxu0 0
        %348 = vmatprep.mubr.bf16.mxu0 0
        %349 = vmatmul.mubr.bf16.gmra.mxu0 %v237
        %v350 = vpop.f32.mrf.mxu0
        %v351 = vadd.f32 %v266, %v350
        %v352 = vpop.f32.mrf.mxu0
        %v353 = vpop.f32.mrf.mxu0
        %v354 = vadd.f32 %v266, %v353
        %v355 = vpop.f32.mrf.mxu0
        %356 = vmatprep.mubr.bf16.mxu0 0
        %357 = vmatmul.mubr.bf16.gmra.mxu0 %v238
        %v358 = vpop.f32.mrf.mxu0
        %v359 = vadd.f32 %v266, %v358
        %v360 = vpop.f32.mrf.mxu0
        %v361 = vpop.f32.mrf.mxu0
        %v362 = vadd.f32 %v266, %v361
        %v363 = vpop.f32.mrf.mxu0
        %364 = vmatprep.mubr.bf16.mxu0 0
        %365 = vmatmul.mubr.bf16.gmra.mxu0 %v239
        %v366 = vpop.f32.mrf.mxu0
        %v367 = vadd.f32 %v266, %v366
        %v368 = vpop.f32.mrf.mxu0
        %v369 = vpop.f32.mrf.mxu0
        %v370 = vadd.f32 %v266, %v369
        %v371 = vpop.f32.mrf.mxu0
        %372 = vmatprep.mubr.bf16.mxu0 0
        %373 = vmatmul.mubr.bf16.gmra.mxu0 %v240
        %v374 = vpop.f32.mrf.mxu0
        %v375 = vadd.f32 %v266, %v374
        %v376 = vpop.f32.mrf.mxu0
        %v377 = vpop.f32.mrf.mxu0
        %v378 = vadd.f32 %v266, %v377
        %v379 = vpop.f32.mrf.mxu0
        %380 = vmatprep.mubr.bf16.mxu0 0
        %381 = vmatmul.mubr.bf16.gmra.mxu0 %v241
        %v382 = vpop.f32.mrf.mxu0
        %v383 = vadd.f32 %v266, %v382
        %v384 = vpop.f32.mrf.mxu0
        %v385 = vpop.f32.mrf.mxu0
        %v386 = vadd.f32 %v266, %v385
        %v387 = vpop.f32.mrf.mxu0
        %388 = vmatprep.mubr.bf16.mxu0 0
        %389 = vmatmul.mubr.bf16.gmra.mxu0 %v242
        %v390 = vpop.f32.mrf.mxu0
        %v391 = vadd.f32 %v266, %v390
        %v392 = vpop.f32.mrf.mxu0
        %v393 = vpop.f32.mrf.mxu0
        %v394 = vadd.f32 %v266, %v393
        %v395 = vpop.f32.mrf.mxu0
        %396 = vmatprep.mubr.bf16.mxu0 0
        %397 = vmatmul.mubr.bf16.gmra.mxu0 %v243
        %v398 = vpop.f32.mrf.mxu0
        %v399 = vadd.f32 %v266, %v398
        %v400 = vpop.f32.mrf.mxu0
        %v401 = vpop.f32.mrf.mxu0
        %v402 = vadd.f32 %v266, %v401
        %v403 = vpop.f32.mrf.mxu0
        %404 = vmatprep.mubr.bf16.mxu0 0
        %405 = vmatmul.mubr.bf16.gmra.mxu0 %v244
        %v406 = vpop.f32.mrf.mxu0
        %v407 = vadd.f32 %v266, %v406
        %v408 = vpop.f32.mrf.mxu0
        %v409 = vpop.f32.mrf.mxu0
        %v410 = vadd.f32 %v266, %v409
        %v411 = vpop.f32.mrf.mxu0
        %412 = vdwg.mxu0
        %v413 = vmax.f32 %v351, 0.0
        %v414 = vmax.f32 %v354, 0.0
        %v415 = vmax.f32 %v359, 0.0
        %v416 = vmax.f32 %v362, 0.0
        %v417 = vmax.f32 %v367, 0.0
        %v418 = vmax.f32 %v370, 0.0
        %v419 = vmax.f32 %v375, 0.0
        %v420 = vmax.f32 %v378, 0.0
        %v421 = vmax.f32 %v383, 0.0
        %v422 = vmax.f32 %v386, 0.0
        %v423 = vmax.f32 %v391, 0.0
        %v424 = vmax.f32 %v394, 0.0
        %v425 = vmax.f32 %v399, 0.0
        %v426 = vmax.f32 %v402, 0.0
        %v427 = vmax.f32 %v407, 0.0
        %v428 = vmax.f32 %v410, 0.0
        %v429 = vpack.c.bf16 %v414, %v413
        %v430 = vpack.c.bf16 %v416, %v415
        %v431 = vpack.c.bf16 %v418, %v417
        %v432 = vpack.c.bf16 %v420, %v419
        %v433 = vpack.c.bf16 %v422, %v421
        %v434 = vpack.c.bf16 %v424, %v423
        %v435 = vpack.c.bf16 %v426, %v425
        %v436 = vpack.c.bf16 %v428, %v427
        %s437 = scalar_lea.vmem [#allocation5], 64
        %v438 = vld [vmem:[%s437] sm:$0xf]
        %v439 = vld [vmem:[%s437 + $0x4] sm:$0xf]
        %v440 = vld [vmem:[%s437 + $0x8] sm:$0xf]
        %v441 = vld [vmem:[%s437 + $0xc] sm:$0xf]
        %v442 = vld [vmem:[%s437 + $0x10] sm:$0xf]
        %v443 = vld [vmem:[%s437 + $0x14] sm:$0xf]
        %v444 = vld [vmem:[%s437 + $0x18] sm:$0xf]
        %v445 = vld [vmem:[%s437 + $0x1c] sm:$0xf]
        %v446 = vld [vmem:[%s437 + $0x20] sm:$0xf]
        %v447 = vld [vmem:[%s437 + $0x24] sm:$0xf]
        %v448 = vld [vmem:[%s437 + $0x28] sm:$0xf]
        %v449 = vld [vmem:[%s437 + $0x2c] sm:$0xf]
        %v450 = vld [vmem:[%s437 + $0x30] sm:$0xf]
        %v451 = vld [vmem:[%s437 + $0x34] sm:$0xf]
        %v452 = vld [vmem:[%s437 + $0x38] sm:$0xf]
        %v453 = vld [vmem:[%s437 + $0x3c] sm:$0xf]
        %s454 = scalar_lea.vmem [#allocation7], 1
        %v455 = vld [vmem:[%s454] sm:$0x1]
        %v457 = vlaneseq
        %v458 = vshrl.u32 %v457, 7
        %v459 = vsub.s32 0, %v458
        %v460 = vrot.slane %v455, %v459
        %v478 = vunpack.c.l.b16 %v438
        %v479 = vunpack.c.l.b16 %v439
        %v480 = vunpack.c.l.b16 %v440
        %v481 = vunpack.c.l.b16 %v441
        %v482 = vunpack.c.l.b16 %v442
        %v483 = vunpack.c.l.b16 %v443
        %v484 = vunpack.c.l.b16 %v444
        %v485 = vunpack.c.l.b16 %v445
        %v486 = vunpack.c.l.b16 %v446
        %v487 = vunpack.c.l.b16 %v447
        %v488 = vunpack.c.l.b16 %v448
        %v489 = vunpack.c.l.b16 %v449
        %v490 = vunpack.c.l.b16 %v450
        %v491 = vunpack.c.l.b16 %v451
        %v492 = vunpack.c.l.b16 %v452
        %v493 = vunpack.c.l.b16 %v453
        %v494 = vpack.c.b16 %v479, %v478
        %v495 = vpack.c.b16 %v481, %v480
        %v496 = vpack.c.b16 %v483, %v482
        %v497 = vpack.c.b16 %v485, %v484
        %v498 = vpack.c.b16 %v487, %v486
        %v499 = vpack.c.b16 %v489, %v488
        %v500 = vpack.c.b16 %v491, %v490
        %v501 = vpack.c.b16 %v493, %v492
        %510 = vmatprep.subr.bf16.mxu0 0
        %511 = vmatpush1.bf16.msra.mxu0 %v501
        %512 = vmatprep.subr.bf16.mxu0 0
        %513 = vmatpush1.bf16.msra.mxu0 %v500
        %514 = vmatprep.subr.bf16.mxu0 0
        %515 = vmatpush1.bf16.msra.mxu0 %v499
        %516 = vmatprep.subr.bf16.mxu0 0
        %517 = vmatpush1.bf16.msra.mxu0 %v498
        %518 = vmatprep.subr.bf16.mxu0 0
        %519 = vmatpush1.bf16.msra.mxu0 %v497
        %520 = vmatprep.subr.bf16.mxu0 0
        %521 = vmatpush1.bf16.msra.mxu0 %v496
        %522 = vmatprep.subr.bf16.mxu0 0
        %523 = vmatpush1.bf16.msra.mxu0 %v495
        %524 = vmatprep.subr.bf16.mxu0 0
        %525 = vmatpush1.bf16.msra.mxu0 %v494
        %526 = vmatprep.subr.bf16.mxu0 0
        %527 = vmatpush2.bf16.msra.mxu0 0
        %528 = vmatprep.subr.bf16.mxu0 0
        %529 = vmatpush2.bf16.msra.mxu0 0
        %530 = vmatprep.subr.bf16.mxu0 0
        %531 = vmatpush2.bf16.msra.mxu0 0
        %532 = vmatprep.subr.bf16.mxu0 0
        %533 = vmatpush2.bf16.msra.mxu0 0
        %534 = vmatprep.subr.bf16.mxu0 0
        %535 = vmatpush2.bf16.msra.mxu0 0
        %536 = vmatprep.subr.bf16.mxu0 0
        %537 = vmatpush2.bf16.msra.mxu0 0
        %538 = vmatprep.subr.bf16.mxu0 0
        %539 = vmatpush2.bf16.msra.mxu0 0
        %540 = vmatprep.subr.bf16.mxu0 0
        %541 = vmatpush2.bf16.msra.mxu0 0
        %542 = vmatprep.mubr.bf16.mxu0 0
        %543 = vmatmul.mubr.bf16.gmra.mxu0 %v429
        %v544 = vpop.f32.mrf.mxu0
        %v545 = vadd.f32 %v460, %v544
        %v546 = vpop.f32.mrf.mxu0
        %v547 = vpop.f32.mrf.mxu0
        %v548 = vadd.f32 %v460, %v547
        %v549 = vpop.f32.mrf.mxu0
        %550 = vmatprep.mubr.bf16.mxu0 0
        %551 = vmatmul.mubr.bf16.gmra.mxu0 %v430
        %v552 = vpop.f32.mrf.mxu0
        %v553 = vadd.f32 %v460, %v552
        %v554 = vpop.f32.mrf.mxu0
        %v555 = vpop.f32.mrf.mxu0
        %v556 = vadd.f32 %v460, %v555
        %v557 = vpop.f32.mrf.mxu0
        %558 = vmatprep.mubr.bf16.mxu0 0
        %559 = vmatmul.mubr.bf16.gmra.mxu0 %v431
        %v560 = vpop.f32.mrf.mxu0
        %v561 = vadd.f32 %v460, %v560
        %v562 = vpop.f32.mrf.mxu0
        %v563 = vpop.f32.mrf.mxu0
        %v564 = vadd.f32 %v460, %v563
        %v565 = vpop.f32.mrf.mxu0
        %566 = vmatprep.mubr.bf16.mxu0 0
        %567 = vmatmul.mubr.bf16.gmra.mxu0 %v432
        %v568 = vpop.f32.mrf.mxu0
        %v569 = vadd.f32 %v460, %v568
        %v570 = vpop.f32.mrf.mxu0
        %v571 = vpop.f32.mrf.mxu0
        %v572 = vadd.f32 %v460, %v571
        %v573 = vpop.f32.mrf.mxu0
        %574 = vmatprep.mubr.bf16.mxu0 0
        %575 = vmatmul.mubr.bf16.gmra.mxu0 %v433
        %v576 = vpop.f32.mrf.mxu0
        %v577 = vadd.f32 %v460, %v576
        %v578 = vpop.f32.mrf.mxu0
        %v579 = vpop.f32.mrf.mxu0
        %v580 = vadd.f32 %v460, %v579
        %v581 = vpop.f32.mrf.mxu0
        %582 = vmatprep.mubr.bf16.mxu0 0
        %583 = vmatmul.mubr.bf16.gmra.mxu0 %v434
        %v584 = vpop.f32.mrf.mxu0
        %v585 = vadd.f32 %v460, %v584
        %v586 = vpop.f32.mrf.mxu0
        %v587 = vpop.f32.mrf.mxu0
        %v588 = vadd.f32 %v460, %v587
        %v589 = vpop.f32.mrf.mxu0
        %590 = vmatprep.mubr.bf16.mxu0 0
        %591 = vmatmul.mubr.bf16.gmra.mxu0 %v435
        %v592 = vpop.f32.mrf.mxu0
        %v593 = vadd.f32 %v460, %v592
        %v594 = vpop.f32.mrf.mxu0
        %v595 = vpop.f32.mrf.mxu0
        %v596 = vadd.f32 %v460, %v595
        %v597 = vpop.f32.mrf.mxu0
        %598 = vmatprep.mubr.bf16.mxu0 0
        %599 = vmatmul.mubr.bf16.gmra.mxu0 %v436
        %v600 = vpop.f32.mrf.mxu0
        %v601 = vadd.f32 %v460, %v600
        %v602 = vpop.f32.mrf.mxu0
        %v603 = vpop.f32.mrf.mxu0
        %v604 = vadd.f32 %v460, %v603
        %v605 = vpop.f32.mrf.mxu0
        %606 = vdwg.mxu0
        %v607 = vmax.f32 %v545, 0.0
        %v608 = vmax.f32 %v548, 0.0
        %v609 = vmax.f32 %v553, 0.0
        %v610 = vmax.f32 %v556, 0.0
        %v611 = vmax.f32 %v561, 0.0
        %v612 = vmax.f32 %v564, 0.0
        %v613 = vmax.f32 %v569, 0.0
        %v614 = vmax.f32 %v572, 0.0
        %v615 = vmax.f32 %v577, 0.0
        %v616 = vmax.f32 %v580, 0.0
        %v617 = vmax.f32 %v585, 0.0
        %v618 = vmax.f32 %v588, 0.0
        %v619 = vmax.f32 %v593, 0.0
        %v620 = vmax.f32 %v596, 0.0
        %v621 = vmax.f32 %v601, 0.0
        %v622 = vmax.f32 %v604, 0.0
        %v623 = vpack.c.bf16 %v608, %v607
        %v624 = vpack.c.bf16 %v610, %v609
        %v625 = vpack.c.bf16 %v612, %v611
        %v626 = vpack.c.bf16 %v614, %v613
        %v627 = vpack.c.bf16 %v616, %v615
        %v628 = vpack.c.bf16 %v618, %v617
        %v629 = vpack.c.bf16 %v620, %v619
        %v630 = vpack.c.bf16 %v622, %v621
        %s631 = scalar_lea.vmem [#allocation5], 128
        %v632 = vld [vmem:[%s631] sm:$0xf]
        %v633 = vld [vmem:[%s631 + $0x4] sm:$0xf]
        %v634 = vld [vmem:[%s631 + $0x8] sm:$0xf]
        %v635 = vld [vmem:[%s631 + $0xc] sm:$0xf]
        %v636 = vld [vmem:[%s631 + $0x10] sm:$0xf]
        %v637 = vld [vmem:[%s631 + $0x14] sm:$0xf]
        %v638 = vld [vmem:[%s631 + $0x18] sm:$0xf]
        %v639 = vld [vmem:[%s631 + $0x1c] sm:$0xf]
        %v640 = vld [vmem:[%s631 + $0x20] sm:$0xf]
        %v641 = vld [vmem:[%s631 + $0x24] sm:$0xf]
        %v642 = vld [vmem:[%s631 + $0x28] sm:$0xf]
        %v643 = vld [vmem:[%s631 + $0x2c] sm:$0xf]
        %v644 = vld [vmem:[%s631 + $0x30] sm:$0xf]
        %v645 = vld [vmem:[%s631 + $0x34] sm:$0xf]
        %v646 = vld [vmem:[%s631 + $0x38] sm:$0xf]
        %v647 = vld [vmem:[%s631 + $0x3c] sm:$0xf]
        %s648 = scalar_lea.vmem [#allocation7], 2
        %v649 = vld [vmem:[%s648] sm:$0x1]
        %v651 = vlaneseq
        %v652 = vshrl.u32 %v651, 7
        %v653 = vsub.s32 0, %v652
        %v654 = vrot.slane %v649, %v653
        %v672 = vunpack.c.l.b16 %v632
        %v673 = vunpack.c.l.b16 %v633
        %v674 = vunpack.c.l.b16 %v634
        %v675 = vunpack.c.l.b16 %v635
        %v676 = vunpack.c.l.b16 %v636
        %v677 = vunpack.c.l.b16 %v637
        %v678 = vunpack.c.l.b16 %v638
        %v679 = vunpack.c.l.b16 %v639
        %v680 = vunpack.c.l.b16 %v640
        %v681 = vunpack.c.l.b16 %v641
        %v682 = vunpack.c.l.b16 %v642
        %v683 = vunpack.c.l.b16 %v643
        %v684 = vunpack.c.l.b16 %v644
        %v685 = vunpack.c.l.b16 %v645
        %v686 = vunpack.c.l.b16 %v646
        %v687 = vunpack.c.l.b16 %v647
        %v688 = vpack.c.b16 %v673, %v672
        %v689 = vpack.c.b16 %v675, %v674
        %v690 = vpack.c.b16 %v677, %v676
        %v691 = vpack.c.b16 %v679, %v678
        %v692 = vpack.c.b16 %v681, %v680
        %v693 = vpack.c.b16 %v683, %v682
        %v694 = vpack.c.b16 %v685, %v684
        %v695 = vpack.c.b16 %v687, %v686
        %704 = vmatprep.subr.bf16.mxu0 0
        %705 = vmatpush1.bf16.msra.mxu0 %v695
        %706 = vmatprep.subr.bf16.mxu0 0
        %707 = vmatpush1.bf16.msra.mxu0 %v694
        %708 = vmatprep.subr.bf16.mxu0 0
        %709 = vmatpush1.bf16.msra.mxu0 %v693
        %710 = vmatprep.subr.bf16.mxu0 0
        %711 = vmatpush1.bf16.msra.mxu0 %v692
        %712 = vmatprep.subr.bf16.mxu0 0
        %713 = vmatpush1.bf16.msra.mxu0 %v691
        %714 = vmatprep.subr.bf16.mxu0 0
        %715 = vmatpush1.bf16.msra.mxu0 %v690
        %716 = vmatprep.subr.bf16.mxu0 0
        %717 = vmatpush1.bf16.msra.mxu0 %v689
        %718 = vmatprep.subr.bf16.mxu0 0
        %719 = vmatpush1.bf16.msra.mxu0 %v688
        %720 = vmatprep.subr.bf16.mxu0 0
        %721 = vmatpush2.bf16.msra.mxu0 0
        %722 = vmatprep.subr.bf16.mxu0 0
        %723 = vmatpush2.bf16.msra.mxu0 0
        %724 = vmatprep.subr.bf16.mxu0 0
        %725 = vmatpush2.bf16.msra.mxu0 0
        %726 = vmatprep.subr.bf16.mxu0 0
        %727 = vmatpush2.bf16.msra.mxu0 0
        %728 = vmatprep.subr.bf16.mxu0 0
        %729 = vmatpush2.bf16.msra.mxu0 0
        %730 = vmatprep.subr.bf16.mxu0 0
        %731 = vmatpush2.bf16.msra.mxu0 0
        %732 = vmatprep.subr.bf16.mxu0 0
        %733 = vmatpush2.bf16.msra.mxu0 0
        %734 = vmatprep.subr.bf16.mxu0 0
        %735 = vmatpush2.bf16.msra.mxu0 0
        %736 = vmatprep.mubr.bf16.mxu0 0
        %737 = vmatmul.mubr.bf16.gmra.mxu0 %v623
        %v738 = vpop.f32.mrf.mxu0
        %v739 = vadd.f32 %v654, %v738
        %v740 = vpop.f32.mrf.mxu0
        %v741 = vpop.f32.mrf.mxu0
        %v742 = vadd.f32 %v654, %v741
        %v743 = vpop.f32.mrf.mxu0
        %744 = vmatprep.mubr.bf16.mxu0 0
        %745 = vmatmul.mubr.bf16.gmra.mxu0 %v624
        %v746 = vpop.f32.mrf.mxu0
        %v747 = vadd.f32 %v654, %v746
        %v748 = vpop.f32.mrf.mxu0
        %v749 = vpop.f32.mrf.mxu0
        %v750 = vadd.f32 %v654, %v749
        %v751 = vpop.f32.mrf.mxu0
        %752 = vmatprep.mubr.bf16.mxu0 0
        %753 = vmatmul.mubr.bf16.gmra.mxu0 %v625
        %v754 = vpop.f32.mrf.mxu0
        %v755 = vadd.f32 %v654, %v754
        %v756 = vpop.f32.mrf.mxu0
        %v757 = vpop.f32.mrf.mxu0
        %v758 = vadd.f32 %v654, %v757
        %v759 = vpop.f32.mrf.mxu0
        %760 = vmatprep.mubr.bf16.mxu0 0
        %761 = vmatmul.mubr.bf16.gmra.mxu0 %v626
        %v762 = vpop.f32.mrf.mxu0
        %v763 = vadd.f32 %v654, %v762
        %v764 = vpop.f32.mrf.mxu0
        %v765 = vpop.f32.mrf.mxu0
        %v766 = vadd.f32 %v654, %v765
        %v767 = vpop.f32.mrf.mxu0
        %768 = vmatprep.mubr.bf16.mxu0 0
        %769 = vmatmul.mubr.bf16.gmra.mxu0 %v627
        %v770 = vpop.f32.mrf.mxu0
        %v771 = vadd.f32 %v654, %v770
        %v772 = vpop.f32.mrf.mxu0
        %v773 = vpop.f32.mrf.mxu0
        %v774 = vadd.f32 %v654, %v773
        %v775 = vpop.f32.mrf.mxu0
        %776 = vmatprep.mubr.bf16.mxu0 0
        %777 = vmatmul.mubr.bf16.gmra.mxu0 %v628
        %v778 = vpop.f32.mrf.mxu0
        %v779 = vadd.f32 %v654, %v778
        %v780 = vpop.f32.mrf.mxu0
        %v781 = vpop.f32.mrf.mxu0
        %v782 = vadd.f32 %v654, %v781
        %v783 = vpop.f32.mrf.mxu0
        %784 = vmatprep.mubr.bf16.mxu0 0
        %785 = vmatmul.mubr.bf16.gmra.mxu0 %v629
        %v786 = vpop.f32.mrf.mxu0
        %v787 = vadd.f32 %v654, %v786
        %v788 = vpop.f32.mrf.mxu0
        %v789 = vpop.f32.mrf.mxu0
        %v790 = vadd.f32 %v654, %v789
        %v791 = vpop.f32.mrf.mxu0
        %792 = vmatprep.mubr.bf16.mxu0 0
        %793 = vmatmul.mubr.bf16.gmra.mxu0 %v630
        %v794 = vpop.f32.mrf.mxu0
        %v795 = vadd.f32 %v654, %v794
        %v796 = vpop.f32.mrf.mxu0
        %v797 = vpop.f32.mrf.mxu0
        %v798 = vadd.f32 %v654, %v797
        %v799 = vpop.f32.mrf.mxu0
        %800 = vdwg.mxu0
        %v801 = vmax.f32 %v739, 0.0
        %v802 = vmax.f32 %v742, 0.0
        %v803 = vmax.f32 %v747, 0.0
        %v804 = vmax.f32 %v750, 0.0
        %v805 = vmax.f32 %v755, 0.0
        %v806 = vmax.f32 %v758, 0.0
        %v807 = vmax.f32 %v763, 0.0
        %v808 = vmax.f32 %v766, 0.0
        %v809 = vmax.f32 %v771, 0.0
        %v810 = vmax.f32 %v774, 0.0
        %v811 = vmax.f32 %v779, 0.0
        %v812 = vmax.f32 %v782, 0.0
        %v813 = vmax.f32 %v787, 0.0
        %v814 = vmax.f32 %v790, 0.0
        %v815 = vmax.f32 %v795, 0.0
        %v816 = vmax.f32 %v798, 0.0
        %v817 = vpack.c.bf16 %v802, %v801
        %v818 = vpack.c.bf16 %v804, %v803
        %v819 = vpack.c.bf16 %v806, %v805
        %v820 = vpack.c.bf16 %v808, %v807
        %v821 = vpack.c.bf16 %v810, %v809
        %v822 = vpack.c.bf16 %v812, %v811
        %v823 = vpack.c.bf16 %v814, %v813
        %v824 = vpack.c.bf16 %v816, %v815
        %s825 = scalar_lea.vmem [#allocation5], 192
        %v826 = vld [vmem:[%s825] sm:$0xf]
        %v827 = vld [vmem:[%s825 + $0x4] sm:$0xf]
        %v828 = vld [vmem:[%s825 + $0x8] sm:$0xf]
        %v829 = vld [vmem:[%s825 + $0xc] sm:$0xf]
        %v830 = vld [vmem:[%s825 + $0x10] sm:$0xf]
        %v831 = vld [vmem:[%s825 + $0x14] sm:$0xf]
        %v832 = vld [vmem:[%s825 + $0x18] sm:$0xf]
        %v833 = vld [vmem:[%s825 + $0x1c] sm:$0xf]
        %v834 = vld [vmem:[%s825 + $0x20] sm:$0xf]
        %v835 = vld [vmem:[%s825 + $0x24] sm:$0xf]
        %v836 = vld [vmem:[%s825 + $0x28] sm:$0xf]
        %v837 = vld [vmem:[%s825 + $0x2c] sm:$0xf]
        %v838 = vld [vmem:[%s825 + $0x30] sm:$0xf]
        %v839 = vld [vmem:[%s825 + $0x34] sm:$0xf]
        %v840 = vld [vmem:[%s825 + $0x38] sm:$0xf]
        %v841 = vld [vmem:[%s825 + $0x3c] sm:$0xf]
        %s842 = scalar_lea.vmem [#allocation7], 3
        %v843 = vld [vmem:[%s842] sm:$0x1]
        %v845 = vlaneseq
        %v846 = vshrl.u32 %v845, 7
        %v847 = vsub.s32 0, %v846
        %v848 = vrot.slane %v843, %v847
        %v866 = vunpack.c.l.b16 %v826
        %v867 = vunpack.c.l.b16 %v827
        %v868 = vunpack.c.l.b16 %v828
        %v869 = vunpack.c.l.b16 %v829
        %v870 = vunpack.c.l.b16 %v830
        %v871 = vunpack.c.l.b16 %v831
        %v872 = vunpack.c.l.b16 %v832
        %v873 = vunpack.c.l.b16 %v833
        %v874 = vunpack.c.l.b16 %v834
        %v875 = vunpack.c.l.b16 %v835
        %v876 = vunpack.c.l.b16 %v836
        %v877 = vunpack.c.l.b16 %v837
        %v878 = vunpack.c.l.b16 %v838
        %v879 = vunpack.c.l.b16 %v839
        %v880 = vunpack.c.l.b16 %v840
        %v881 = vunpack.c.l.b16 %v841
        %v882 = vpack.c.b16 %v867, %v866
        %v883 = vpack.c.b16 %v869, %v868
        %v884 = vpack.c.b16 %v871, %v870
        %v885 = vpack.c.b16 %v873, %v872
        %v886 = vpack.c.b16 %v875, %v874
        %v887 = vpack.c.b16 %v877, %v876
        %v888 = vpack.c.b16 %v879, %v878
        %v889 = vpack.c.b16 %v881, %v880
        %898 = vmatprep.subr.bf16.mxu0 0
        %899 = vmatpush1.bf16.msra.mxu0 %v889
        %900 = vmatprep.subr.bf16.mxu0 0
        %901 = vmatpush1.bf16.msra.mxu0 %v888
        %902 = vmatprep.subr.bf16.mxu0 0
        %903 = vmatpush1.bf16.msra.mxu0 %v887
        %904 = vmatprep.subr.bf16.mxu0 0
        %905 = vmatpush1.bf16.msra.mxu0 %v886
        %906 = vmatprep.subr.bf16.mxu0 0
        %907 = vmatpush1.bf16.msra.mxu0 %v885
        %908 = vmatprep.subr.bf16.mxu0 0
        %909 = vmatpush1.bf16.msra.mxu0 %v884
        %910 = vmatprep.subr.bf16.mxu0 0
        %911 = vmatpush1.bf16.msra.mxu0 %v883
        %912 = vmatprep.subr.bf16.mxu0 0
        %913 = vmatpush1.bf16.msra.mxu0 %v882
        %914 = vmatprep.subr.bf16.mxu0 0
        %915 = vmatpush2.bf16.msra.mxu0 0
        %916 = vmatprep.subr.bf16.mxu0 0
        %917 = vmatpush2.bf16.msra.mxu0 0
        %918 = vmatprep.subr.bf16.mxu0 0
        %919 = vmatpush2.bf16.msra.mxu0 0
        %920 = vmatprep.subr.bf16.mxu0 0
        %921 = vmatpush2.bf16.msra.mxu0 0
        %922 = vmatprep.subr.bf16.mxu0 0
        %923 = vmatpush2.bf16.msra.mxu0 0
        %924 = vmatprep.subr.bf16.mxu0 0
        %925 = vmatpush2.bf16.msra.mxu0 0
        %926 = vmatprep.subr.bf16.mxu0 0
        %927 = vmatpush2.bf16.msra.mxu0 0
        %928 = vmatprep.subr.bf16.mxu0 0
        %929 = vmatpush2.bf16.msra.mxu0 0
        %930 = vmatprep.mubr.bf16.mxu0 0
        %931 = vmatmul.mubr.bf16.gmra.mxu0 %v817
        %v932 = vpop.f32.mrf.mxu0
        %v933 = vadd.f32 %v848, %v932
        %v934 = vpop.f32.mrf.mxu0
        %v935 = vpop.f32.mrf.mxu0
        %v936 = vadd.f32 %v848, %v935
        %v937 = vpop.f32.mrf.mxu0
        %938 = vmatprep.mubr.bf16.mxu0 0
        %939 = vmatmul.mubr.bf16.gmra.mxu0 %v818
        %v940 = vpop.f32.mrf.mxu0
        %v941 = vadd.f32 %v848, %v940
        %v942 = vpop.f32.mrf.mxu0
        %v943 = vpop.f32.mrf.mxu0
        %v944 = vadd.f32 %v848, %v943
        %v945 = vpop.f32.mrf.mxu0
        %946 = vmatprep.mubr.bf16.mxu0 0
        %947 = vmatmul.mubr.bf16.gmra.mxu0 %v819
        %v948 = vpop.f32.mrf.mxu0
        %v949 = vadd.f32 %v848, %v948
        %v950 = vpop.f32.mrf.mxu0
        %v951 = vpop.f32.mrf.mxu0
        %v952 = vadd.f32 %v848, %v951
        %v953 = vpop.f32.mrf.mxu0
        %954 = vmatprep.mubr.bf16.mxu0 0
        %955 = vmatmul.mubr.bf16.gmra.mxu0 %v820
        %v956 = vpop.f32.mrf.mxu0
        %v957 = vadd.f32 %v848, %v956
        %v958 = vpop.f32.mrf.mxu0
        %v959 = vpop.f32.mrf.mxu0
        %v960 = vadd.f32 %v848, %v959
        %v961 = vpop.f32.mrf.mxu0
        %962 = vmatprep.mubr.bf16.mxu0 0
        %963 = vmatmul.mubr.bf16.gmra.mxu0 %v821
        %v964 = vpop.f32.mrf.mxu0
        %v965 = vadd.f32 %v848, %v964
        %v966 = vpop.f32.mrf.mxu0
        %v967 = vpop.f32.mrf.mxu0
        %v968 = vadd.f32 %v848, %v967
        %v969 = vpop.f32.mrf.mxu0
        %970 = vmatprep.mubr.bf16.mxu0 0
        %971 = vmatmul.mubr.bf16.gmra.mxu0 %v822
        %v972 = vpop.f32.mrf.mxu0
        %v973 = vadd.f32 %v848, %v972
        %v974 = vpop.f32.mrf.mxu0
        %v975 = vpop.f32.mrf.mxu0
        %v976 = vadd.f32 %v848, %v975
        %v977 = vpop.f32.mrf.mxu0
        %978 = vmatprep.mubr.bf16.mxu0 0
        %979 = vmatmul.mubr.bf16.gmra.mxu0 %v823
        %v980 = vpop.f32.mrf.mxu0
        %v981 = vadd.f32 %v848, %v980
        %v982 = vpop.f32.mrf.mxu0
        %v983 = vpop.f32.mrf.mxu0
        %v984 = vadd.f32 %v848, %v983
        %v985 = vpop.f32.mrf.mxu0
        %986 = vmatprep.mubr.bf16.mxu0 0
        %987 = vmatmul.mubr.bf16.gmra.mxu0 %v824
        %v988 = vpop.f32.mrf.mxu0
        %v989 = vadd.f32 %v848, %v988
        %v990 = vpop.f32.mrf.mxu0
        %v991 = vpop.f32.mrf.mxu0
        %v992 = vadd.f32 %v848, %v991
        %v993 = vpop.f32.mrf.mxu0
        %994 = vdwg.mxu0
        %v995 = vmax.f32 %v933, 0.0
        %v996 = vmax.f32 %v936, 0.0
        %v997 = vmax.f32 %v941, 0.0
        %v998 = vmax.f32 %v944, 0.0
        %v999 = vmax.f32 %v949, 0.0
        %v1000 = vmax.f32 %v952, 0.0
        %v1001 = vmax.f32 %v957, 0.0
        %v1002 = vmax.f32 %v960, 0.0
        %v1003 = vmax.f32 %v965, 0.0
        %v1004 = vmax.f32 %v968, 0.0
        %v1005 = vmax.f32 %v973, 0.0
        %v1006 = vmax.f32 %v976, 0.0
        %v1007 = vmax.f32 %v981, 0.0
        %v1008 = vmax.f32 %v984, 0.0
        %v1009 = vmax.f32 %v989, 0.0
        %v1010 = vmax.f32 %v992, 0.0
        %v1011 = vpack.c.bf16 %v996, %v995
        %v1012 = vpack.c.bf16 %v998, %v997
        %v1013 = vpack.c.bf16 %v1000, %v999
        %v1014 = vpack.c.bf16 %v1002, %v1001
        %v1015 = vpack.c.bf16 %v1004, %v1003
        %v1016 = vpack.c.bf16 %v1006, %v1005
        %v1017 = vpack.c.bf16 %v1008, %v1007
        %v1018 = vpack.c.bf16 %v1010, %v1009
        %v1019 = vunpack.c.l.bf16 %v1011
        %v1020 = vunpack.c.h.bf16 %v1011
        %v1021 = vunpack.c.l.bf16 %v1012
        %v1022 = vunpack.c.h.bf16 %v1012
        %v1023 = vunpack.c.l.bf16 %v1013
        %v1024 = vunpack.c.h.bf16 %v1013
        %v1025 = vunpack.c.l.bf16 %v1014
        %v1026 = vunpack.c.h.bf16 %v1014
        %v1027 = vunpack.c.l.bf16 %v1015
        %v1028 = vunpack.c.h.bf16 %v1015
        %v1029 = vunpack.c.l.bf16 %v1016
        %v1030 = vunpack.c.h.bf16 %v1016
        %v1031 = vunpack.c.l.bf16 %v1017
        %v1032 = vunpack.c.h.bf16 %v1017
        %v1033 = vunpack.c.l.bf16 %v1018
        %v1034 = vunpack.c.h.bf16 %v1018
        %1035 = vst [vmem:[%s217] sm:$0xff] %v1019
        %1036 = vst [vmem:[%s217 + $0x8] sm:$0xff] %v1020
        %1037 = vst [vmem:[%s217 + $0x10] sm:$0xff] %v1021
        %1038 = vst [vmem:[%s217 + $0x18] sm:$0xff] %v1022
        %1039 = vst [vmem:[%s217 + $0x20] sm:$0xff] %v1023
        %1040 = vst [vmem:[%s217 + $0x28] sm:$0xff] %v1024
        %1041 = vst [vmem:[%s217 + $0x30] sm:$0xff] %v1025
        %1042 = vst [vmem:[%s217 + $0x38] sm:$0xff] %v1026
        %1043 = vst [vmem:[%s217 + $0x40] sm:$0xff] %v1027
        %1044 = vst [vmem:[%s217 + $0x48] sm:$0xff] %v1028
        %1045 = vst [vmem:[%s217 + $0x50] sm:$0xff] %v1029
        %1046 = vst [vmem:[%s217 + $0x58] sm:$0xff] %v1030
        %1047 = vst [vmem:[%s217 + $0x60] sm:$0xff] %v1031
        %1048 = vst [vmem:[%s217 + $0x68] sm:$0xff] %v1032
        %1049 = vst [vmem:[%s217 + $0x70] sm:$0xff] %v1033
        %1050 = vst [vmem:[%s217 + $0x78] sm:$0xff] %v1034
        %s1051 = sand.u32 %s97, 1
        %s1052 = scalar_lea.sflag [#allocation4], %s1051
        %s1053 = sand.u32 %s97, 1
        %s1054 = smul.addr %s1053, 128
        %s1055 = scalar_lea.vmem [#allocation8], %s1054
        // Predicated region
        $region45: #{tpu_custom_call.1} parent=31 // pred_check
          %p1056 = pneg %p107
        $region46: #{tpu_custom_call.1} parent=31 // pred_check_branch
          %1058 = sbr.rel (%p1056) target = $region48
        $region47: #{tpu_custom_call.1} parent=31 // pred_region
          %s1059 = smul.u32 16, %s21
          %s1061 = ssub.s32 2048, 2048
          %1062 = vsyncadd %s1052, %s1061
          %s1063 = smul.addr %s1059, 128
          %s1064 = scalar_lea.hbm %s3, %s1063
          %s1065 = sshll.u32 %s1055, 4
          %s1066 = int_to_ptr.vmem [resolvable:$true] %s1065
          %1071 = dma.vmem_to_hbm [thread:$0]  %s1066, 2048, %s1064, %s1052, 128, 128, 8
        $region48: #{tpu_custom_call.1} parent=31 // pred_fallthru
          _
      $region32: #{tpu_custom_call.1} parent=5 // pred_fallthru
        _
      %p1072 = scmp.le.s32.totalorder 2, %s16
      // Predicated region
      $region49: #{tpu_custom_call.1} parent=5 // pred_check
        %p1073 = pneg %p1072
      $region50: #{tpu_custom_call.1} parent=5 // pred_check_branch
        %1075 = sbr.rel (%p1073) target = $region52
      $region51: #{tpu_custom_call.1} parent=5 // pred_region
        %s1076 = ssub.s32 %s16, 2
        // Predicated region
        $region53: #{tpu_custom_call.1} parent=51 // pred_check
          %p1077 = pneg %p113
        $region54: #{tpu_custom_call.1} parent=51 // pred_check_branch
          %1079 = sbr.rel (%p1077) target = $region56
        $region55: #{tpu_custom_call.1} parent=51 // pred_region
          %s1080 = sand.u32 %s98, 1
          %s1081 = scalar_lea.sflag [#allocation4], %s1080
          %s1082 = sand.u32 %s98, 1
          %s1083 = smul.addr %s1082, 128
          %s1084 = scalar_lea.vmem [#allocation8], %s1083
          %1085 = dma.done %s1081, 2048
        $region56: #{tpu_custom_call.1} parent=51 // pred_fallthru
          _
      $region52: #{tpu_custom_call.1} parent=5 // pred_fallthru
        _
    $region6: #{tpu_custom_call.1} parent=1 // loop_footer
      %s20 = sadd.s32 1, %s16
    $region7: #{tpu_custom_call.1} parent=1 // loop_footer_branch
      %15 = sbr.rel target = $region3
    $region8: #{tpu_custom_call.1} parent=1 // loop_exit
      _
    %1086 = vsyncpa [#allocation3], 1
    %s1087 = scalar_lea.sflag [#allocation3], 1
    %1088 = vsyncpa %s1087, 1
    %1089 = vsyncpa [#allocation6], 1
    %1090 = vsyncpa [#allocation4], 1
    %s1091 = scalar_lea.sflag [#allocation4], 1
    %1092 = vsyncpa %s1091, 1

// kernel: tpu_custom_call.1
$region0: #{tpu_custom_call.1}
  #allocation0 [shape = 'u32[]', space=smem, size = 0x4, offset = 0x4, fixed_abs, tag = 'smem constant byte address 0x4 - core index']
  #allocation1 [shape = 'u32[144,128]{1,0:T(1,128)}', space=vmem, size = 0x12000, scoped, tag = 'internal scratch']
  %s0 = inlined_call_operand.hbm [shape: f32[256,128], index: 0, kind: input, shape index: {}]
  %s1 = inlined_call_operand.hbm [shape: bf16[4,128,128], index: 1, kind: input, shape index: {}]
  %s2 = inlined_call_operand.hbm [shape: f32[4,1,128], index: 2, kind: input, shape index: {}]
  %s3 = inlined_call_operand.hbm [shape: f32[256,128], index: 3, kind: output, shape index: {}]
  %s4 = sld [smem:[#allocation0]]
  $region57: #{tpu_custom_call.1} parent=0
    _
  %s6 = ssub.s32 1, %s4
  %s7 = scalar_select 0, %s6, %s4
  $region1: #{tpu_custom_call.1} parent=0
    #allocation2 [shape = 'u8[131072]{0}', space=vmem, size = 0x20000, scoped, tag = 'input window, operand 0']
    #allocation3 [shape = 's32[2]{0}', space=sflag, size = 0x8, scoped, tag = 'scoped memory for tpu_custom_call.1']
    #allocation4 [shape = 's32[2]{0}', space=sflag, size = 0x8, scoped, tag = 'scoped memory for tpu_custom_call.1']
    #allocation5 [shape = 'u8[131072]{0}', space=vmem, size = 0x20000, scoped, tag = 'input window, operand 1, single buffered']
    #allocation6 [shape = 's32[1]{0}', space=sflag, size = 0x4, scoped, tag = 'scoped memory for tpu_custom_call.1']
    #allocation7 [shape = 'u8[2048]{0}', space=vmem, size = 0x800, scoped, tag = 'input window, operand 2, single buffered']
    #allocation8 [shape = 'u8[131072]{0}', space=vmem, size = 0x20000, scoped, tag = 'output window, operand 0']
    %8 = vsyncpa [#allocation3], 0
    %s9 = scalar_lea.sflag [#allocation3], 1
    %10 = vsyncpa %s9, 0
    %11 = vsyncpa [#allocation6], 0
    %12 = vsyncpa [#allocation4], 0
    %s13 = scalar_lea.sflag [#allocation4], 1
    %14 = vsyncpa %s13, 0
    loop: start=0, step=1, limit=4
    $region2: #{tpu_custom_call.1} parent=1 // loop_pre_header
      _
    $region3: #{tpu_custom_call.1} parent=1 // loop_header
      %s16 = sphi 0, %s20
      %p17 = scmp.ge.s32.totalorder %s16, 4
      %s26 = sphi 0, %s28
      %s29 = sphi 0, %s26
      %s30 = sphi 0, %s29
      %s46 = sphi 0, %s30
      %s50 = sphi 0, %s50
      %s52 = sphi 0, %s50
      %s53 = sphi 0, %s52
      %s67 = sphi 0, %s53
      %s71 = sphi 0, %s71
      %s73 = sphi 0, %s71
      %s74 = sphi 0, %s73
      %s88 = sphi 0, %s74
      %s94 = sphi 0, %s96
      %s97 = sphi 0, %s94
      %s98 = sphi 0, %s97
      %s114 = sphi 0, %s98
    $region4: #{tpu_custom_call.1} parent=1 // loop_header_branch
      %19 = sbr.rel (%p17) target = $region8
    $region5: #{tpu_custom_call.1} parent=1 // loop_body
      %s21 = ssub.s32 %s16, 1
      %s22 = ssub.s32 %s16, 2
      %s23 = sadd.s32 %s16, 1
      %s24 = ssub.s32 %s16, %s23
      %p25 = scmp.eq.s32.totalorder %s24, 0
      %s27 = sadd.s32 %s26, 1
      %s28 = scalar_select %p25, %s26, %s27
      %p31 = pneg %p25
      %p32 = scmp.eq.s32.totalorder %s16, 1
      %p33 = por %p31, %p32
      %p34 = scmp.ne.s32.totalorder %s26, %s29
      %p35 = scmp.eq.s32.totalorder %s16, 0
      %p36 = por %p34, %p35
      %p37 = scmp.ne.s32.totalorder %s26, %s29
      %p38 = scmp.eq.s32.totalorder %s21, 1
      %p39 = por %p37, %p38
      %p40 = scmp.ne.s32.totalorder %s29, %s30
      %p41 = scmp.eq.s32.totalorder %s21, 0
      %p42 = por %p40, %p41
      %p43 = scmp.ne.s32.totalorder %s29, %s30
      %p44 = scmp.eq.s32.totalorder %s22, 1
      %p45 = por %p43, %p44
      %p47 = scmp.ne.s32.totalorder %s30, %s46
      %p48 = scmp.eq.s32.totalorder %s22, 0
      %p49 = por %p47, %p48
      %s51 = sadd.s32 %s50, 1
      %p54 = scmp.eq.s32.totalorder %s16, 1
      %p55 = scmp.ne.s32.totalorder %s50, %s52
      %p56 = scmp.eq.s32.totalorder %s16, 0
      %p57 = por %p55, %p56
      %p58 = scmp.ne.s32.totalorder %s50, %s52
      %p59 = scmp.eq.s32.totalorder %s21, 1
      %p60 = por %p58, %p59
      %p61 = scmp.ne.s32.totalorder %s52, %s53
      %p62 = scmp.eq.s32.totalorder %s21, 0
      %p63 = por %p61, %p62
      %p64 = scmp.ne.s32.totalorder %s52, %s53
      %p65 = scmp.eq.s32.totalorder %s22, 1
      %p66 = por %p64, %p65
      %p68 = scmp.ne.s32.totalorder %s53, %s67
      %p69 = scmp.eq.s32.totalorder %s22, 0
      %p70 = por %p68, %p69
      %s72 = sadd.s32 %s71, 1
      %p75 = scmp.eq.s32.totalorder %s16, 1
      %p76 = scmp.ne.s32.totalorder %s71, %s73
      %p77 = scmp.eq.s32.totalorder %s16, 0
      %p78 = por %p76, %p77
      %p79 = scmp.ne.s32.totalorder %s71, %s73
      %p80 = scmp.eq.s32.totalorder %s21, 1
      %p81 = por %p79, %p80
      %p82 = scmp.ne.s32.totalorder %s73, %s74
      %p83 = scmp.eq.s32.totalorder %s21, 0
      %p84 = por %p82, %p83
      %p85 = scmp.ne.s32.totalorder %s73, %s74
      %p86 = scmp.eq.s32.totalorder %s22, 1
      %p87 = por %p85, %p86
      %p89 = scmp.ne.s32.totalorder %s74, %s88
      %p90 = scmp.eq.s32.totalorder %s22, 0
      %p91 = por %p89, %p90
      %s92 = ssub.s32 %s16, %s23
      %p93 = scmp.eq.s32.totalorder %s92, 0
      %s95 = sadd.s32 %s94, 1
      %s96 = scalar_select %p93, %s94, %s95
      %p99 = pneg %p93
      %p100 = scmp.eq.s32.totalorder %s16, 1
      %p101 = por %p99, %p100
      %p102 = scmp.ne.s32.totalorder %s94, %s97
      %p103 = scmp.eq.s32.totalorder %s16, 0
      %p104 = por %p102, %p103
      %p105 = scmp.ne.s32.totalorder %s94, %s97
      %p106 = scmp.eq.s32.totalorder %s21, 1
      %p107 = por %p105, %p106
      %p108 = scmp.ne.s32.totalorder %s97, %s98
      %p109 = scmp.eq.s32.totalorder %s21, 0
      %p110 = por %p108, %p109
      %p111 = scmp.ne.s32.totalorder %s97, %s98
      %p112 = scmp.eq.s32.totalorder %s22, 1
      %p113 = por %p111, %p112
      %p115 = scmp.ne.s32.totalorder %s98, %s114
      %p116 = scmp.eq.s32.totalorder %s22, 0
      %p117 = por %p115, %p116
      %p118 = scmp.le.s32.totalorder 1, %s16
      %p119 = scmp.lt.s32.totalorder %s16, 3
      %p120 = pnand %p118, %p119
      %p121 = pneg %p120
      // Predicated region
      $region9: #{tpu_custom_call.1} parent=5 // pred_check
        _
      $region10: #{tpu_custom_call.1} parent=5 // pred_check_branch
        %123 = sbr.rel (%p120) target = $region12
      $region11: #{tpu_custom_call.1} parent=5 // pred_region
        %s124 = ssub.s32 %s16, 1
        // Predicated region
        $region13: #{tpu_custom_call.1} parent=11 // pred_check
          %p125 = pneg %p63
        $region14: #{tpu_custom_call.1} parent=11 // pred_check_branch
          %127 = sbr.rel (%p125) target = $region16
        $region15: #{tpu_custom_call.1} parent=11 // pred_region
          %s129 = ssub.s32 4096, 4096
          %130 = vsyncadd [#allocation6], %s129
          %s131 = sshll.u32 [#allocation5], 4
          %s132 = int_to_ptr.vmem [resolvable:$true] %s131
          %137 = dma.hbm_to_vmem [thread:$0]  %s1, 4096, %s132, [#allocation6], 64, 64, 4
        $region16: #{tpu_custom_call.1} parent=11 // pred_fallthru
          _
        // Predicated region
        $region17: #{tpu_custom_call.1} parent=11 // pred_check
          %p138 = pneg %p84
        $region18: #{tpu_custom_call.1} parent=11 // pred_check_branch
          %140 = sbr.rel (%p138) target = $region20
        $region19: #{tpu_custom_call.1} parent=11 // pred_region
          %s142 = ssub.s32 64, 64
          %143 = vsyncadd [#allocation6], %s142
          %s144 = sshll.u32 [#allocation7], 4
          %s145 = int_to_ptr.vmem [resolvable:$true] %s144
          %150 = dma.hbm_to_vmem [thread:$0]  %s2, 64, %s145, [#allocation6], 16, 16, 1
        $region20: #{tpu_custom_call.1} parent=11 // pred_fallthru
          _
      $region12: #{tpu_custom_call.1} parent=5 // pred_fallthru
        _
      %p151 = scmp.lt.s32.totalorder %s16, 2
      // Predicated region
      $region21: #{tpu_custom_call.1} parent=5 // pred_check
        %p152 = pneg %p151
      $region22: #{tpu_custom_call.1} parent=5 // pred_check_branch
        %154 = sbr.rel (%p152) target = $region24
      $region23: #{tpu_custom_call.1} parent=5 // pred_region
        // Predicated region
        $region25: #{tpu_custom_call.1} parent=23 // pred_check
          %p155 = pneg %p36
        $region26: #{tpu_custom_call.1} parent=23 // pred_check_branch
          %157 = sbr.rel (%p155) target = $region28
        $region27: #{tpu_custom_call.1} parent=23 // pred_region
          %s158 = sand.u32 %s26, 1
          %s159 = scalar_lea.sflag [#allocation3], %s158
          %s160 = sand.u32 %s26, 1
          %s161 = smul.addr %s160, 128
          %s162 = scalar_lea.vmem [#allocation2], %s161
          %s163 = smul.u32 16, %s16
          %s165 = ssub.s32 2048, 2048
          %166 = vsyncadd %s159, %s165
          %s167 = smul.addr %s163, 128
          %s168 = scalar_lea.hbm %s0, %s167
          %s169 = sshll.u32 %s162, 4
          %s170 = int_to_ptr.vmem [resolvable:$true] %s169
          %175 = dma.hbm_to_vmem [thread:$0]  %s168, 2048, %s170, %s159, 128, 128, 8
        $region28: #{tpu_custom_call.1} parent=23 // pred_fallthru
          _
      $region24: #{tpu_custom_call.1} parent=5 // pred_fallthru
        _
      %p176 = scmp.le.s32.totalorder 1, %s16
      %p177 = scmp.lt.s32.totalorder %s16, 3
      %p178 = pnand %p176, %p177
      %p179 = pneg %p178
      // Predicated region
      $region29: #{tpu_custom_call.1} parent=5 // pred_check
        _
      $region30: #{tpu_custom_call.1} parent=5 // pred_check_branch
        %181 = sbr.rel (%p178) target = $region32
      $region31: #{tpu_custom_call.1} parent=5 // pred_region
        %s182 = ssub.s32 %s16, 1
        %s183 = sand.u32 %s29, 1
        %s184 = scalar_lea.sflag [#allocation3], %s183
        %s185 = sand.u32 %s29, 1
        %s186 = smul.addr %s185, 128
        %s187 = scalar_lea.vmem [#allocation2], %s186
        // Predicated region
        $region33: #{tpu_custom_call.1} parent=31 // pred_check
          %p188 = pneg %p42
        $region34: #{tpu_custom_call.1} parent=31 // pred_check_branch
          %190 = sbr.rel (%p188) target = $region36
        $region35: #{tpu_custom_call.1} parent=31 // pred_region
          %191 = dma.done %s184, 2048
        $region36: #{tpu_custom_call.1} parent=31 // pred_fallthru
          _
        // Predicated region
        $region37: #{tpu_custom_call.1} parent=31 // pred_check
          %p192 = pneg %p63
        $region38: #{tpu_custom_call.1} parent=31 // pred_check_branch
          %194 = sbr.rel (%p192) target = $region40
        $region39: #{tpu_custom_call.1} parent=31 // pred_region
          %195 = dma.done [#allocation6], 4096
        $region40: #{tpu_custom_call.1} parent=31 // pred_fallthru
          _
        // Predicated region
        $region41: #{tpu_custom_call.1} parent=31 // pred_check
          %p196 = pneg %p84
        $region42: #{tpu_custom_call.1} parent=31 // pred_check_branch
          %198 = sbr.rel (%p196) target = $region44
        $region43: #{tpu_custom_call.1} parent=31 // pred_region
          %199 = dma.done [#allocation6], 64
        $region44: #{tpu_custom_call.1} parent=31 // pred_fallthru
          _
        %s200 = sand.u32 %s29, 1
        %s201 = scalar_lea.sflag [#allocation3], %s200
        %s202 = sand.u32 %s29, 1
        %s203 = smul.addr %s202, 128
        %s204 = scalar_lea.vmem [#allocation2], %s203
        %p205 = pneg %p42
        %p206 = pneg %p39
        %p207 = pneg %p63
        %p208 = pneg %p60
        %p209 = pneg %p84
        %p210 = pneg %p81
        %p211 = pneg %p110
        %p212 = pneg %p107
        %s213 = sand.u32 %s97, 1
        %s214 = scalar_lea.sflag [#allocation4], %s213
        %s215 = sand.u32 %s97, 1
        %s216 = smul.addr %s215, 128
        %s217 = scalar_lea.vmem [#allocation8], %s216
        %s218 = smul.u32 16, %s21
        %s219 = smul.u32 16, %s21
        %v221 = vld [vmem:[%s187] sm:$0xff]
        %v222 = vld [vmem:[%s187 + $0x8] sm:$0xff]
        %v223 = vld [vmem:[%s187 + $0x10] sm:$0xff]
        %v224 = vld [vmem:[%s187 + $0x18] sm:$0xff]
        %v225 = vld [vmem:[%s187 + $0x20] sm:$0xff]
        %v226 = vld [vmem:[%s187 + $0x28] sm:$0xff]
        %v227 = vld [vmem:[%s187 + $0x30] sm:$0xff]
        %v228 = vld [vmem:[%s187 + $0x38] sm:$0xff]
        %v229 = vld [vmem:[%s187 + $0x40] sm:$0xff]
        %v230 = vld [vmem:[%s187 + $0x48] sm:$0xff]
        %v231 = vld [vmem:[%s187 + $0x50] sm:$0xff]
        %v232 = vld [vmem:[%s187 + $0x58] sm:$0xff]
        %v233 = vld [vmem:[%s187 + $0x60] sm:$0xff]
        %v234 = vld [vmem:[%s187 + $0x68] sm:$0xff]
        %v235 = vld [vmem:[%s187 + $0x70] sm:$0xff]
        %v236 = vld [vmem:[%s187 + $0x78] sm:$0xff]
        %v237 = vpack.c.bf16 %v222, %v221
        %v238 = vpack.c.bf16 %v224, %v223
        %v239 = vpack.c.bf16 %v226, %v225
        %v240 = vpack.c.bf16 %v228, %v227
        %v241 = vpack.c.bf16 %v230, %v229
        %v242 = vpack.c.bf16 %v232, %v231
        %v243 = vpack.c.bf16 %v234, %v233
        %v244 = vpack.c.bf16 %v236, %v235
        %v245 = vld [vmem:[#allocation5] sm:$0xf]
        %v246 = vld [vmem:[#allocation5 + $0x4] sm:$0xf]
        %v247 = vld [vmem:[#allocation5 + $0x8] sm:$0xf]
        %v248 = vld [vmem:[#allocation5 + $0xc] sm:$0xf]
        %v249 = vld [vmem:[#allocation5 + $0x10] sm:$0xf]
        %v250 = vld [vmem:[#allocation5 + $0x14] sm:$0xf]
        %v251 = vld [vmem:[#allocation5 + $0x18] sm:$0xf]
        %v252 = vld [vmem:[#allocation5 + $0x1c] sm:$0xf]
        %v253 = vld [vmem:[#allocation5 + $0x20] sm:$0xf]
        %v254 = vld [vmem:[#allocation5 + $0x24] sm:$0xf]
        %v255 = vld [vmem:[#allocation5 + $0x28] sm:$0xf]
        %v256 = vld [vmem:[#allocation5 + $0x2c] sm:$0xf]
        %v257 = vld [vmem:[#allocation5 + $0x30] sm:$0xf]
        %v258 = vld [vmem:[#allocation5 + $0x34] sm:$0xf]
        %v259 = vld [vmem:[#allocation5 + $0x38] sm:$0xf]
        %v260 = vld [vmem:[#allocation5 + $0x3c] sm:$0xf]
        %v261 = vld [vmem:[#allocation7] sm:$0x1]
        %v263 = vlaneseq
        %v264 = vshrl.u32 %v263, 7
        %v265 = vsub.s32 0, %v264
        %v266 = vrot.slane %v261, %v265
        %v284 = vunpack.c.l.b16 %v245
        %v285 = vunpack.c.l.b16 %v246
        %v286 = vunpack.c.l.b16 %v247
        %v287 = vunpack.c.l.b16 %v248
        %v288 = vunpack.c.l.b16 %v249
        %v289 = vunpack.c.l.b16 %v250
        %v290 = vunpack.c.l.b16 %v251
        %v291 = vunpack.c.l.b16 %v252
        %v292 = vunpack.c.l.b16 %v253
        %v293 = vunpack.c.l.b16 %v254
        %v294 = vunpack.c.l.b16 %v255
        %v295 = vunpack.c.l.b16 %v256
        %v296 = vunpack.c.l.b16 %v257
        %v297 = vunpack.c.l.b16 %v258
        %v298 = vunpack.c.l.b16 %v259
        %v299 = vunpack.c.l.b16 %v260
        %v300 = vpack.c.b16 %v285, %v284
        %v301 = vpack.c.b16 %v287, %v286
        %v302 = vpack.c.b16 %v289, %v288
        %v303 = vpack.c.b16 %v291, %v290
        %v304 = vpack.c.b16 %v293, %v292
        %v305 = vpack.c.b16 %v295, %v294
        %v306 = vpack.c.b16 %v297, %v296
        %v307 = vpack.c.b16 %v299, %v298
        %316 = vmatprep.subr.bf16.mxu0 0
        %317 = vmatpush1.bf16.msra.mxu0 %v307
        %318 = vmatprep.subr.bf16.mxu0 0
        %319 = vmatpush1.bf16.msra.mxu0 %v306
        %320 = vmatprep.subr.bf16.mxu0 0
        %321 = vmatpush1.bf16.msra.mxu0 %v305
        %322 = vmatprep.subr.bf16.mxu0 0
        %323 = vmatpush1.bf16.msra.mxu0 %v304
        %324 = vmatprep.subr.bf16.mxu0 0
        %325 = vmatpush1.bf16.msra.mxu0 %v303
        %326 = vmatprep.subr.bf16.mxu0 0
        %327 = vmatpush1.bf16.msra.mxu0 %v302
        %328 = vmatprep.subr.bf16.mxu0 0
        %329 = vmatpush1.bf16.msra.mxu0 %v301
        %330 = vmatprep.subr.bf16.mxu0 0
        %331 = vmatpush1.bf16.msra.mxu0 %v300
        %332 = vmatprep.subr.bf16.mxu0 0
        %333 = vmatpush2.bf16.msra.mxu0 0
        %334 = vmatprep.subr.bf16.mxu0 0
        %335 = vmatpush2.bf16.msra.mxu0 0
        %336 = vmatprep.subr.bf16.mxu0 0
        %337 = vmatpush2.bf16.msra.mxu0 0
        %338 = vmatprep.subr.bf16.mxu0 0
        %339 = vmatpush2.bf16.msra.mxu0 0
        %340 = vmatprep.subr.bf16.mxu0 0
        %341 = vmatpush2.bf16.msra.mxu0 0
        %342 = vmatprep.subr.bf16.mxu0 0
        %343 = vmatpush2.bf16.msra.mxu0 0
        %344 = vmatprep.subr.bf16.mxu0 0
        %345 = vmatpush2.bf16.msra.mxu0 0
        %346 = vmatprep.subr.bf16.mxu0 0
        %347 = vmatpush2.bf16.msra.mxu0 0
        %348 = vmatprep.mubr.bf16.mxu0 0
        %349 = vmatmul.mubr.bf16.gmra.mxu0 %v237
        %v350 = vpop.f32.mrf.mxu0
        %v351 = vadd.f32 %v266, %v350
        %v352 = vpop.f32.mrf.mxu0
        %v353 = vpop.f32.mrf.mxu0
        %v354 = vadd.f32 %v266, %v353
        %v355 = vpop.f32.mrf.mxu0
        %356 = vmatprep.mubr.bf16.mxu0 0
        %357 = vmatmul.mubr.bf16.gmra.mxu0 %v238
        %v358 = vpop.f32.mrf.mxu0
        %v359 = vadd.f32 %v266, %v358
        %v360 = vpop.f32.mrf.mxu0
        %v361 = vpop.f32.mrf.mxu0
        %v362 = vadd.f32 %v266, %v361
        %v363 = vpop.f32.mrf.mxu0
        %364 = vmatprep.mubr.bf16.mxu0 0
        %365 = vmatmul.mubr.bf16.gmra.mxu0 %v239
        %v366 = vpop.f32.mrf.mxu0
        %v367 = vadd.f32 %v266, %v366
        %v368 = vpop.f32.mrf.mxu0
        %v369 = vpop.f32.mrf.mxu0
        %v370 = vadd.f32 %v266, %v369
        %v371 = vpop.f32.mrf.mxu0
        %372 = vmatprep.mubr.bf16.mxu0 0
        %373 = vmatmul.mubr.bf16.gmra.mxu0 %v240
        %v374 = vpop.f32.mrf.mxu0
        %v375 = vadd.f32 %v266, %v374
        %v376 = vpop.f32.mrf.mxu0
        %v377 = vpop.f32.mrf.mxu0
        %v378 = vadd.f32 %v266, %v377
        %v379 = vpop.f32.mrf.mxu0
        %380 = vmatprep.mubr.bf16.mxu0 0
        %381 = vmatmul.mubr.bf16.gmra.mxu0 %v241
        %v382 = vpop.f32.mrf.mxu0
        %v383 = vadd.f32 %v266, %v382
        %v384 = vpop.f32.mrf.mxu0
        %v385 = vpop.f32.mrf.mxu0
        %v386 = vadd.f32 %v266, %v385
        %v387 = vpop.f32.mrf.mxu0
        %388 = vmatprep.mubr.bf16.mxu0 0
        %389 = vmatmul.mubr.bf16.gmra.mxu0 %v242
        %v390 = vpop.f32.mrf.mxu0
        %v391 = vadd.f32 %v266, %v390
        %v392 = vpop.f32.mrf.mxu0
        %v393 = vpop.f32.mrf.mxu0
        %v394 = vadd.f32 %v266, %v393
        %v395 = vpop.f32.mrf.mxu0
        %396 = vmatprep.mubr.bf16.mxu0 0
        %397 = vmatmul.mubr.bf16.gmra.mxu0 %v243
        %v398 = vpop.f32.mrf.mxu0
        %v399 = vadd.f32 %v266, %v398
        %v400 = vpop.f32.mrf.mxu0
        %v401 = vpop.f32.mrf.mxu0
        %v402 = vadd.f32 %v266, %v401
        %v403 = vpop.f32.mrf.mxu0
        %404 = vmatprep.mubr.bf16.mxu0 0
        %405 = vmatmul.mubr.bf16.gmra.mxu0 %v244
        %v406 = vpop.f32.mrf.mxu0
        %v407 = vadd.f32 %v266, %v406
        %v408 = vpop.f32.mrf.mxu0
        %v409 = vpop.f32.mrf.mxu0
        %v410 = vadd.f32 %v266, %v409
        %v411 = vpop.f32.mrf.mxu0
        %412 = vdwg.mxu0
        %v413 = vmax.f32 %v351, 0.0
        %v414 = vmax.f32 %v354, 0.0
        %v415 = vmax.f32 %v359, 0.0
        %v416 = vmax.f32 %v362, 0.0
        %v417 = vmax.f32 %v367, 0.0
        %v418 = vmax.f32 %v370, 0.0
        %v419 = vmax.f32 %v375, 0.0
        %v420 = vmax.f32 %v378, 0.0
        %v421 = vmax.f32 %v383, 0.0
        %v422 = vmax.f32 %v386, 0.0
        %v423 = vmax.f32 %v391, 0.0
        %v424 = vmax.f32 %v394, 0.0
        %v425 = vmax.f32 %v399, 0.0
        %v426 = vmax.f32 %v402, 0.0
        %v427 = vmax.f32 %v407, 0.0
        %v428 = vmax.f32 %v410, 0.0
        %v429 = vpack.c.bf16 %v414, %v413
        %v430 = vpack.c.bf16 %v416, %v415
        %v431 = vpack.c.bf16 %v418, %v417
        %v432 = vpack.c.bf16 %v420, %v419
        %v433 = vpack.c.bf16 %v422, %v421
        %v434 = vpack.c.bf16 %v424, %v423
        %v435 = vpack.c.bf16 %v426, %v425
        %v436 = vpack.c.bf16 %v428, %v427
        %s437 = scalar_lea.vmem [#allocation5], 64
        %v438 = vld [vmem:[%s437] sm:$0xf]
        %v439 = vld [vmem:[%s437 + $0x4] sm:$0xf]
        %v440 = vld [vmem:[%s437 + $0x8] sm:$0xf]
        %v441 = vld [vmem:[%s437 + $0xc] sm:$0xf]
        %v442 = vld [vmem:[%s437 + $0x10] sm:$0xf]
        %v443 = vld [vmem:[%s437 + $0x14] sm:$0xf]
        %v444 = vld [vmem:[%s437 + $0x18] sm:$0xf]
        %v445 = vld [vmem:[%s437 + $0x1c] sm:$0xf]
        %v446 = vld [vmem:[%s437 + $0x20] sm:$0xf]
        %v447 = vld [vmem:[%s437 + $0x24] sm:$0xf]
        %v448 = vld [vmem:[%s437 + $0x28] sm:$0xf]
        %v449 = vld [vmem:[%s437 + $0x2c] sm:$0xf]
        %v450 = vld [vmem:[%s437 + $0x30] sm:$0xf]
        %v451 = vld [vmem:[%s437 + $0x34] sm:$0xf]
        %v452 = vld [vmem:[%s437 + $0x38] sm:$0xf]
        %v453 = vld [vmem:[%s437 + $0x3c] sm:$0xf]
        %s454 = scalar_lea.vmem [#allocation7], 1
        %v455 = vld [vmem:[%s454] sm:$0x1]
        %v457 = vlaneseq
        %v458 = vshrl.u32 %v457, 7
        %v459 = vsub.s32 0, %v458
        %v460 = vrot.slane %v455, %v459
        %v478 = vunpack.c.l.b16 %v438
        %v479 = vunpack.c.l.b16 %v439
        %v480 = vunpack.c.l.b16 %v440
        %v481 = vunpack.c.l.b16 %v441
        %v482 = vunpack.c.l.b16 %v442
        %v483 = vunpack.c.l.b16 %v443
        %v484 = vunpack.c.l.b16 %v444
        %v485 = vunpack.c.l.b16 %v445
        %v486 = vunpack.c.l.b16 %v446
        %v487 = vunpack.c.l.b16 %v447
        %v488 = vunpack.c.l.b16 %v448
        %v489 = vunpack.c.l.b16 %v449
        %v490 = vunpack.c.l.b16 %v450
        %v491 = vunpack.c.l.b16 %v451
        %v492 = vunpack.c.l.b16 %v452
        %v493 = vunpack.c.l.b16 %v453
        %v494 = vpack.c.b16 %v479, %v478
        %v495 = vpack.c.b16 %v481, %v480
        %v496 = vpack.c.b16 %v483, %v482
        %v497 = vpack.c.b16 %v485, %v484
        %v498 = vpack.c.b16 %v487, %v486
        %v499 = vpack.c.b16 %v489, %v488
        %v500 = vpack.c.b16 %v491, %v490
        %v501 = vpack.c.b16 %v493, %v492
        %510 = vmatprep.subr.bf16.mxu0 0
        %511 = vmatpush1.bf16.msra.mxu0 %v501
        %512 = vmatprep.subr.bf16.mxu0 0
        %513 = vmatpush1.bf16.msra.mxu0 %v500
        %514 = vmatprep.subr.bf16.mxu0 0
        %515 = vmatpush1.bf16.msra.mxu0 %v499
        %516 = vmatprep.subr.bf16.mxu0 0
        %517 = vmatpush1.bf16.msra.mxu0 %v498
        %518 = vmatprep.subr.bf16.mxu0 0
        %519 = vmatpush1.bf16.msra.mxu0 %v497
        %520 = vmatprep.subr.bf16.mxu0 0
        %521 = vmatpush1.bf16.msra.mxu0 %v496
        %522 = vmatprep.subr.bf16.mxu0 0
        %523 = vmatpush1.bf16.msra.mxu0 %v495
        %524 = vmatprep.subr.bf16.mxu0 0
        %525 = vmatpush1.bf16.msra.mxu0 %v494
        %526 = vmatprep.subr.bf16.mxu0 0
        %527 = vmatpush2.bf16.msra.mxu0 0
        %528 = vmatprep.subr.bf16.mxu0 0
        %529 = vmatpush2.bf16.msra.mxu0 0
        %530 = vmatprep.subr.bf16.mxu0 0
        %531 = vmatpush2.bf16.msra.mxu0 0
        %532 = vmatprep.subr.bf16.mxu0 0
        %533 = vmatpush2.bf16.msra.mxu0 0
        %534 = vmatprep.subr.bf16.mxu0 0
        %535 = vmatpush2.bf16.msra.mxu0 0
        %536 = vmatprep.subr.bf16.mxu0 0
        %537 = vmatpush2.bf16.msra.mxu0 0
        %538 = vmatprep.subr.bf16.mxu0 0
        %539 = vmatpush2.bf16.msra.mxu0 0
        %540 = vmatprep.subr.bf16.mxu0 0
        %541 = vmatpush2.bf16.msra.mxu0 0
        %542 = vmatprep.mubr.bf16.mxu0 0
        %543 = vmatmul.mubr.bf16.gmra.mxu0 %v429
        %v544 = vpop.f32.mrf.mxu0
        %v545 = vadd.f32 %v460, %v544
        %v546 = vpop.f32.mrf.mxu0
        %v547 = vpop.f32.mrf.mxu0
        %v548 = vadd.f32 %v460, %v547
        %v549 = vpop.f32.mrf.mxu0
        %550 = vmatprep.mubr.bf16.mxu0 0
        %551 = vmatmul.mubr.bf16.gmra.mxu0 %v430
        %v552 = vpop.f32.mrf.mxu0
        %v553 = vadd.f32 %v460, %v552
        %v554 = vpop.f32.mrf.mxu0
        %v555 = vpop.f32.mrf.mxu0
        %v556 = vadd.f32 %v460, %v555
        %v557 = vpop.f32.mrf.mxu0
        %558 = vmatprep.mubr.bf16.mxu0 0
        %559 = vmatmul.mubr.bf16.gmra.mxu0 %v431
        %v560 = vpop.f32.mrf.mxu0
        %v561 = vadd.f32 %v460, %v560
        %v562 = vpop.f32.mrf.mxu0
        %v563 = vpop.f32.mrf.mxu0
        %v564 = vadd.f32 %v460, %v563
        %v565 = vpop.f32.mrf.mxu0
        %566 = vmatprep.mubr.bf16.mxu0 0
        %567 = vmatmul.mubr.bf16.gmra.mxu0 %v432
        %v568 = vpop.f32.mrf.mxu0
        %v569 = vadd.f32 %v460, %v568
        %v570 = vpop.f32.mrf.mxu0
        %v571 = vpop.f32.mrf.mxu0
        %v572 = vadd.f32 %v460, %v571
        %v573 = vpop.f32.mrf.mxu0
        %574 = vmatprep.mubr.bf16.mxu0 0
        %575 = vmatmul.mubr.bf16.gmra.mxu0 %v433
        %v576 = vpop.f32.mrf.mxu0
        %v577 = vadd.f32 %v460, %v576
        %v578 = vpop.f32.mrf.mxu0
        %v579 = vpop.f32.mrf.mxu0
        %v580 = vadd.f32 %v460, %v579
        %v581 = vpop.f32.mrf.mxu0
        %582 = vmatprep.mubr.bf16.mxu0 0
        %583 = vmatmul.mubr.bf16.gmra.mxu0 %v434
        %v584 = vpop.f32.mrf.mxu0
        %v585 = vadd.f32 %v460, %v584
        %v586 = vpop.f32.mrf.mxu0
        %v587 = vpop.f32.mrf.mxu0
        %v588 = vadd.f32 %v460, %v587
        %v589 = vpop.f32.mrf.mxu0
        %590 = vmatprep.mubr.bf16.mxu0 0
        %591 = vmatmul.mubr.bf16.gmra.mxu0 %v435
        %v592 = vpop.f32.mrf.mxu0
        %v593 = vadd.f32 %v460, %v592
        %v594 = vpop.f32.mrf.mxu0
        %v595 = vpop.f32.mrf.mxu0
        %v596 = vadd.f32 %v460, %v595
        %v597 = vpop.f32.mrf.mxu0
        %598 = vmatprep.mubr.bf16.mxu0 0
        %599 = vmatmul.mubr.bf16.gmra.mxu0 %v436
        %v600 = vpop.f32.mrf.mxu0
        %v601 = vadd.f32 %v460, %v600
        %v602 = vpop.f32.mrf.mxu0
        %v603 = vpop.f32.mrf.mxu0
        %v604 = vadd.f32 %v460, %v603
        %v605 = vpop.f32.mrf.mxu0
        %606 = vdwg.mxu0
        %v607 = vmax.f32 %v545, 0.0
        %v608 = vmax.f32 %v548, 0.0
        %v609 = vmax.f32 %v553, 0.0
        %v610 = vmax.f32 %v556, 0.0
        %v611 = vmax.f32 %v561, 0.0
        %v612 = vmax.f32 %v564, 0.0
        %v613 = vmax.f32 %v569, 0.0
        %v614 = vmax.f32 %v572, 0.0
        %v615 = vmax.f32 %v577, 0.0
        %v616 = vmax.f32 %v580, 0.0
        %v617 = vmax.f32 %v585, 0.0
        %v618 = vmax.f32 %v588, 0.0
        %v619 = vmax.f32 %v593, 0.0
        %v620 = vmax.f32 %v596, 0.0
        %v621 = vmax.f32 %v601, 0.0
        %v622 = vmax.f32 %v604, 0.0
        %v623 = vpack.c.bf16 %v608, %v607
        %v624 = vpack.c.bf16 %v610, %v609
        %v625 = vpack.c.bf16 %v612, %v611
        %v626 = vpack.c.bf16 %v614, %v613
        %v627 = vpack.c.bf16 %v616, %v615
        %v628 = vpack.c.bf16 %v618, %v617
        %v629 = vpack.c.bf16 %v620, %v619
        %v630 = vpack.c.bf16 %v622, %v621
        %s631 = scalar_lea.vmem [#allocation5], 128
        %v632 = vld [vmem:[%s631] sm:$0xf]
        %v633 = vld [vmem:[%s631 + $0x4] sm:$0xf]
        %v634 = vld [vmem:[%s631 + $0x8] sm:$0xf]
        %v635 = vld [vmem:[%s631 + $0xc] sm:$0xf]
        %v636 = vld [vmem:[%s631 + $0x10] sm:$0xf]
        %v637 = vld [vmem:[%s631 + $0x14] sm:$0xf]
        %v638 = vld [vmem:[%s631 + $0x18] sm:$0xf]
        %v639 = vld [vmem:[%s631 + $0x1c] sm:$0xf]
        %v640 = vld [vmem:[%s631 + $0x20] sm:$0xf]
        %v641 = vld [vmem:[%s631 + $0x24] sm:$0xf]
        %v642 = vld [vmem:[%s631 + $0x28] sm:$0xf]
        %v643 = vld [vmem:[%s631 + $0x2c] sm:$0xf]
        %v644 = vld [vmem:[%s631 + $0x30] sm:$0xf]
        %v645 = vld [vmem:[%s631 + $0x34] sm:$0xf]
        %v646 = vld [vmem:[%s631 + $0x38] sm:$0xf]
        %v647 = vld [vmem:[%s631 + $0x3c] sm:$0xf]
        %s648 = scalar_lea.vmem [#allocation7], 2
        %v649 = vld [vmem:[%s648] sm:$0x1]
        %v651 = vlaneseq
        %v652 = vshrl.u32 %v651, 7
        %v653 = vsub.s32 0, %v652
        %v654 = vrot.slane %v649, %v653
        %v672 = vunpack.c.l.b16 %v632
        %v673 = vunpack.c.l.b16 %v633
        %v674 = vunpack.c.l.b16 %v634
        %v675 = vunpack.c.l.b16 %v635
        %v676 = vunpack.c.l.b16 %v636
        %v677 = vunpack.c.l.b16 %v637
        %v678 = vunpack.c.l.b16 %v638
        %v679 = vunpack.c.l.b16 %v639
        %v680 = vunpack.c.l.b16 %v640
        %v681 = vunpack.c.l.b16 %v641
        %v682 = vunpack.c.l.b16 %v642
        %v683 = vunpack.c.l.b16 %v643
        %v684 = vunpack.c.l.b16 %v644
        %v685 = vunpack.c.l.b16 %v645
        %v686 = vunpack.c.l.b16 %v646
        %v687 = vunpack.c.l.b16 %v647
        %v688 = vpack.c.b16 %v673, %v672
        %v689 = vpack.c.b16 %v675, %v674
        %v690 = vpack.c.b16 %v677, %v676
        %v691 = vpack.c.b16 %v679, %v678
        %v692 = vpack.c.b16 %v681, %v680
        %v693 = vpack.c.b16 %v683, %v682
        %v694 = vpack.c.b16 %v685, %v684
        %v695 = vpack.c.b16 %v687, %v686
        %704 = vmatprep.subr.bf16.mxu0 0
        %705 = vmatpush1.bf16.msra.mxu0 %v695
        %706 = vmatprep.subr.bf16.mxu0 0
        %707 = vmatpush1.bf16.msra.mxu0 %v694
        %708 = vmatprep.subr.bf16.mxu0 0
        %709 = vmatpush1.bf16.msra.mxu0 %v693
        %710 = vmatprep.subr.bf16.mxu0 0
        %711 = vmatpush1.bf16.msra.mxu0 %v692
        %712 = vmatprep.subr.bf16.mxu0 0
        %713 = vmatpush1.bf16.msra.mxu0 %v691
        %714 = vmatprep.subr.bf16.mxu0 0
        %715 = vmatpush1.bf16.msra.mxu0 %v690
        %716 = vmatprep.subr.bf16.mxu0 0
        %717 = vmatpush1.bf16.msra.mxu0 %v689
        %718 = vmatprep.subr.bf16.mxu0 0
        %719 = vmatpush1.bf16.msra.mxu0 %v688
        %720 = vmatprep.subr.bf16.mxu0 0
        %721 = vmatpush2.bf16.msra.mxu0 0
        %722 = vmatprep.subr.bf16.mxu0 0
        %723 = vmatpush2.bf16.msra.mxu0 0
        %724 = vmatprep.subr.bf16.mxu0 0
        %725 = vmatpush2.bf16.msra.mxu0 0
        %726 = vmatprep.subr.bf16.mxu0 0
        %727 = vmatpush2.bf16.msra.mxu0 0
        %728 = vmatprep.subr.bf16.mxu0 0
        %729 = vmatpush2.bf16.msra.mxu0 0
        %730 = vmatprep.subr.bf16.mxu0 0
        %731 = vmatpush2.bf16.msra.mxu0 0
        %732 = vmatprep.subr.bf16.mxu0 0
        %733 = vmatpush2.bf16.msra.mxu0 0
        %734 = vmatprep.subr.bf16.mxu0 0
        %735 = vmatpush2.bf16.msra.mxu0 0
        %736 = vmatprep.mubr.bf16.mxu0 0
        %737 = vmatmul.mubr.bf16.gmra.mxu0 %v623
        %v738 = vpop.f32.mrf.mxu0
        %v739 = vadd.f32 %v654, %v738
        %v740 = vpop.f32.mrf.mxu0
        %v741 = vpop.f32.mrf.mxu0
        %v742 = vadd.f32 %v654, %v741
        %v743 = vpop.f32.mrf.mxu0
        %744 = vmatprep.mubr.bf16.mxu0 0
        %745 = vmatmul.mubr.bf16.gmra.mxu0 %v624
        %v746 = vpop.f32.mrf.mxu0
        %v747 = vadd.f32 %v654, %v746
        %v748 = vpop.f32.mrf.mxu0
        %v749 = vpop.f32.mrf.mxu0
        %v750 = vadd.f32 %v654, %v749
        %v751 = vpop.f32.mrf.mxu0
        %752 = vmatprep.mubr.bf16.mxu0 0
        %753 = vmatmul.mubr.bf16.gmra.mxu0 %v625
        %v754 = vpop.f32.mrf.mxu0
        %v755 = vadd.f32 %v654, %v754
        %v756 = vpop.f32.mrf.mxu0
        %v757 = vpop.f32.mrf.mxu0
        %v758 = vadd.f32 %v654, %v757
        %v759 = vpop.f32.mrf.mxu0
        %760 = vmatprep.mubr.bf16.mxu0 0
        %761 = vmatmul.mubr.bf16.gmra.mxu0 %v626
        %v762 = vpop.f32.mrf.mxu0
        %v763 = vadd.f32 %v654, %v762
        %v764 = vpop.f32.mrf.mxu0
        %v765 = vpop.f32.mrf.mxu0
        %v766 = vadd.f32 %v654, %v765
        %v767 = vpop.f32.mrf.mxu0
        %768 = vmatprep.mubr.bf16.mxu0 0
        %769 = vmatmul.mubr.bf16.gmra.mxu0 %v627
        %v770 = vpop.f32.mrf.mxu0
        %v771 = vadd.f32 %v654, %v770
        %v772 = vpop.f32.mrf.mxu0
        %v773 = vpop.f32.mrf.mxu0
        %v774 = vadd.f32 %v654, %v773
        %v775 = vpop.f32.mrf.mxu0
        %776 = vmatprep.mubr.bf16.mxu0 0
        %777 = vmatmul.mubr.bf16.gmra.mxu0 %v628
        %v778 = vpop.f32.mrf.mxu0
        %v779 = vadd.f32 %v654, %v778
        %v780 = vpop.f32.mrf.mxu0
        %v781 = vpop.f32.mrf.mxu0
        %v782 = vadd.f32 %v654, %v781
        %v783 = vpop.f32.mrf.mxu0
        %784 = vmatprep.mubr.bf16.mxu0 0
        %785 = vmatmul.mubr.bf16.gmra.mxu0 %v629
        %v786 = vpop.f32.mrf.mxu0
        %v787 = vadd.f32 %v654, %v786
        %v788 = vpop.f32.mrf.mxu0
        %v789 = vpop.f32.mrf.mxu0
        %v790 = vadd.f32 %v654, %v789
        %v791 = vpop.f32.mrf.mxu0
        %792 = vmatprep.mubr.bf16.mxu0 0
        %793 = vmatmul.mubr.bf16.gmra.mxu0 %v630
        %v794 = vpop.f32.mrf.mxu0
        %v795 = vadd.f32 %v654, %v794
        %v796 = vpop.f32.mrf.mxu0
        %v797 = vpop.f32.mrf.mxu0
        %v798 = vadd.f32 %v654, %v797
        %v799 = vpop.f32.mrf.mxu0
        %800 = vdwg.mxu0
        %v801 = vmax.f32 %v739, 0.0
        %v802 = vmax.f32 %v742, 0.0
        %v803 = vmax.f32 %v747, 0.0
        %v804 = vmax.f32 %v750, 0.0
        %v805 = vmax.f32 %v755, 0.0
        %v806 = vmax.f32 %v758, 0.0
        %v807 = vmax.f32 %v763, 0.0
        %v808 = vmax.f32 %v766, 0.0
        %v809 = vmax.f32 %v771, 0.0
        %v810 = vmax.f32 %v774, 0.0
        %v811 = vmax.f32 %v779, 0.0
        %v812 = vmax.f32 %v782, 0.0
        %v813 = vmax.f32 %v787, 0.0
        %v814 = vmax.f32 %v790, 0.0
        %v815 = vmax.f32 %v795, 0.0
        %v816 = vmax.f32 %v798, 0.0
        %v817 = vpack.c.bf16 %v802, %v801
        %v818 = vpack.c.bf16 %v804, %v803
        %v819 = vpack.c.bf16 %v806, %v805
        %v820 = vpack.c.bf16 %v808, %v807
        %v821 = vpack.c.bf16 %v810, %v809
        %v822 = vpack.c.bf16 %v812, %v811
        %v823 = vpack.c.bf16 %v814, %v813
        %v824 = vpack.c.bf16 %v816, %v815
        %s825 = scalar_lea.vmem [#allocation5], 192
        %v826 = vld [vmem:[%s825] sm:$0xf]
        %v827 = vld [vmem:[%s825 + $0x4] sm:$0xf]
        %v828 = vld [vmem:[%s825 + $0x8] sm:$0xf]
        %v829 = vld [vmem:[%s825 + $0xc] sm:$0xf]
        %v830 = vld [vmem:[%s825 + $0x10] sm:$0xf]
        %v831 = vld [vmem:[%s825 + $0x14] sm:$0xf]
        %v832 = vld [vmem:[%s825 + $0x18] sm:$0xf]
        %v833 = vld [vmem:[%s825 + $0x1c] sm:$0xf]
        %v834 = vld [vmem:[%s825 + $0x20] sm:$0xf]
        %v835 = vld [vmem:[%s825 + $0x24] sm:$0xf]
        %v836 = vld [vmem:[%s825 + $0x28] sm:$0xf]
        %v837 = vld [vmem:[%s825 + $0x2c] sm:$0xf]
        %v838 = vld [vmem:[%s825 + $0x30] sm:$0xf]
        %v839 = vld [vmem:[%s825 + $0x34] sm:$0xf]
        %v840 = vld [vmem:[%s825 + $0x38] sm:$0xf]
        %v841 = vld [vmem:[%s825 + $0x3c] sm:$0xf]
        %s842 = scalar_lea.vmem [#allocation7], 3
        %v843 = vld [vmem:[%s842] sm:$0x1]
        %v845 = vlaneseq
        %v846 = vshrl.u32 %v845, 7
        %v847 = vsub.s32 0, %v846
        %v848 = vrot.slane %v843, %v847
        %v866 = vunpack.c.l.b16 %v826
        %v867 = vunpack.c.l.b16 %v827
        %v868 = vunpack.c.l.b16 %v828
        %v869 = vunpack.c.l.b16 %v829
        %v870 = vunpack.c.l.b16 %v830
        %v871 = vunpack.c.l.b16 %v831
        %v872 = vunpack.c.l.b16 %v832
        %v873 = vunpack.c.l.b16 %v833
        %v874 = vunpack.c.l.b16 %v834
        %v875 = vunpack.c.l.b16 %v835
        %v876 = vunpack.c.l.b16 %v836
        %v877 = vunpack.c.l.b16 %v837
        %v878 = vunpack.c.l.b16 %v838
        %v879 = vunpack.c.l.b16 %v839
        %v880 = vunpack.c.l.b16 %v840
        %v881 = vunpack.c.l.b16 %v841
        %v882 = vpack.c.b16 %v867, %v866
        %v883 = vpack.c.b16 %v869, %v868
        %v884 = vpack.c.b16 %v871, %v870
        %v885 = vpack.c.b16 %v873, %v872
        %v886 = vpack.c.b16 %v875, %v874
        %v887 = vpack.c.b16 %v877, %v876
        %v888 = vpack.c.b16 %v879, %v878
        %v889 = vpack.c.b16 %v881, %v880
        %898 = vmatprep.subr.bf16.mxu0 0
        %899 = vmatpush1.bf16.msra.mxu0 %v889
        %900 = vmatprep.subr.bf16.mxu0 0
        %901 = vmatpush1.bf16.msra.mxu0 %v888
        %902 = vmatprep.subr.bf16.mxu0 0
        %903 = vmatpush1.bf16.msra.mxu0 %v887
        %904 = vmatprep.subr.bf16.mxu0 0
        %905 = vmatpush1.bf16.msra.mxu0 %v886
        %906 = vmatprep.subr.bf16.mxu0 0
        %907 = vmatpush1.bf16.msra.mxu0 %v885
        %908 = vmatprep.subr.bf16.mxu0 0
        %909 = vmatpush1.bf16.msra.mxu0 %v884
        %910 = vmatprep.subr.bf16.mxu0 0
        %911 = vmatpush1.bf16.msra.mxu0 %v883
        %912 = vmatprep.subr.bf16.mxu0 0
        %913 = vmatpush1.bf16.msra.mxu0 %v882
        %914 = vmatprep.subr.bf16.mxu0 0
        %915 = vmatpush2.bf16.msra.mxu0 0
        %916 = vmatprep.subr.bf16.mxu0 0
        %917 = vmatpush2.bf16.msra.mxu0 0
        %918 = vmatprep.subr.bf16.mxu0 0
        %919 = vmatpush2.bf16.msra.mxu0 0
        %920 = vmatprep.subr.bf16.mxu0 0
        %921 = vmatpush2.bf16.msra.mxu0 0
        %922 = vmatprep.subr.bf16.mxu0 0
        %923 = vmatpush2.bf16.msra.mxu0 0
        %924 = vmatprep.subr.bf16.mxu0 0
        %925 = vmatpush2.bf16.msra.mxu0 0
        %926 = vmatprep.subr.bf16.mxu0 0
        %927 = vmatpush2.bf16.msra.mxu0 0
        %928 = vmatprep.subr.bf16.mxu0 0
        %929 = vmatpush2.bf16.msra.mxu0 0
        %930 = vmatprep.mubr.bf16.mxu0 0
        %931 = vmatmul.mubr.bf16.gmra.mxu0 %v817
        %v932 = vpop.f32.mrf.mxu0
        %v933 = vadd.f32 %v848, %v932
        %v934 = vpop.f32.mrf.mxu0
        %v935 = vpop.f32.mrf.mxu0
        %v936 = vadd.f32 %v848, %v935
        %v937 = vpop.f32.mrf.mxu0
        %938 = vmatprep.mubr.bf16.mxu0 0
        %939 = vmatmul.mubr.bf16.gmra.mxu0 %v818
        %v940 = vpop.f32.mrf.mxu0
        %v941 = vadd.f32 %v848, %v940
        %v942 = vpop.f32.mrf.mxu0
        %v943 = vpop.f32.mrf.mxu0
        %v944 = vadd.f32 %v848, %v943
        %v945 = vpop.f32.mrf.mxu0
        %946 = vmatprep.mubr.bf16.mxu0 0
        %947 = vmatmul.mubr.bf16.gmra.mxu0 %v819
        %v948 = vpop.f32.mrf.mxu0
        %v949 = vadd.f32 %v848, %v948
        %v950 = vpop.f32.mrf.mxu0
        %v951 = vpop.f32.mrf.mxu0
        %v952 = vadd.f32 %v848, %v951
        %v953 = vpop.f32.mrf.mxu0
        %954 = vmatprep.mubr.bf16.mxu0 0
        %955 = vmatmul.mubr.bf16.gmra.mxu0 %v820
        %v956 = vpop.f32.mrf.mxu0
        %v957 = vadd.f32 %v848, %v956
        %v958 = vpop.f32.mrf.mxu0
        %v959 = vpop.f32.mrf.mxu0
        %v960 = vadd.f32 %v848, %v959
        %v961 = vpop.f32.mrf.mxu0
        %962 = vmatprep.mubr.bf16.mxu0 0
        %963 = vmatmul.mubr.bf16.gmra.mxu0 %v821
        %v964 = vpop.f32.mrf.mxu0
        %v965 = vadd.f32 %v848, %v964
        %v966 = vpop.f32.mrf.mxu0
        %v967 = vpop.f32.mrf.mxu0
        %v968 = vadd.f32 %v848, %v967
        %v969 = vpop.f32.mrf.mxu0
        %970 = vmatprep.mubr.bf16.mxu0 0
        %971 = vmatmul.mubr.bf16.gmra.mxu0 %v822
        %v972 = vpop.f32.mrf.mxu0
        %v973 = vadd.f32 %v848, %v972
        %v974 = vpop.f32.mrf.mxu0
        %v975 = vpop.f32.mrf.mxu0
        %v976 = vadd.f32 %v848, %v975
        %v977 = vpop.f32.mrf.mxu0
        %978 = vmatprep.mubr.bf16.mxu0 0
        %979 = vmatmul.mubr.bf16.gmra.mxu0 %v823
        %v980 = vpop.f32.mrf.mxu0
        %v981 = vadd.f32 %v848, %v980
        %v982 = vpop.f32.mrf.mxu0
        %v983 = vpop.f32.mrf.mxu0
        %v984 = vadd.f32 %v848, %v983
        %v985 = vpop.f32.mrf.mxu0
        %986 = vmatprep.mubr.bf16.mxu0 0
        %987 = vmatmul.mubr.bf16.gmra.mxu0 %v824
        %v988 = vpop.f32.mrf.mxu0
        %v989 = vadd.f32 %v848, %v988
        %v990 = vpop.f32.mrf.mxu0
        %v991 = vpop.f32.mrf.mxu0
        %v992 = vadd.f32 %v848, %v991
        %v993 = vpop.f32.mrf.mxu0
        %994 = vdwg.mxu0
        %v995 = vmax.f32 %v933, 0.0
        %v996 = vmax.f32 %v936, 0.0
        %v997 = vmax.f32 %v941, 0.0
        %v998 = vmax.f32 %v944, 0.0
        %v999 = vmax.f32 %v949, 0.0
        %v1000 = vmax.f32 %v952, 0.0
        %v1001 = vmax.f32 %v957, 0.0
        %v1002 = vmax.f32 %v960, 0.0
        %v1003 = vmax.f32 %v965, 0.0
        %v1004 = vmax.f32 %v968, 0.0
        %v1005 = vmax.f32 %v973, 0.0
        %v1006 = vmax.f32 %v976, 0.0
        %v1007 = vmax.f32 %v981, 0.0
        %v1008 = vmax.f32 %v984, 0.0
        %v1009 = vmax.f32 %v989, 0.0
        %v1010 = vmax.f32 %v992, 0.0
        %v1011 = vpack.c.bf16 %v996, %v995
        %v1012 = vpack.c.bf16 %v998, %v997
        %v1013 = vpack.c.bf16 %v1000, %v999
        %v1014 = vpack.c.bf16 %v1002, %v1001
        %v1015 = vpack.c.bf16 %v1004, %v1003
        %v1016 = vpack.c.bf16 %v1006, %v1005
        %v1017 = vpack.c.bf16 %v1008, %v1007
        %v1018 = vpack.c.bf16 %v1010, %v1009
        %v1019 = vunpack.c.l.bf16 %v1011
        %v1020 = vunpack.c.h.bf16 %v1011
        %v1021 = vunpack.c.l.bf16 %v1012
        %v1022 = vunpack.c.h.bf16 %v1012
        %v1023 = vunpack.c.l.bf16 %v1013
        %v1024 = vunpack.c.h.bf16 %v1013
        %v1025 = vunpack.c.l.bf16 %v1014
        %v1026 = vunpack.c.h.bf16 %v1014
        %v1027 = vunpack.c.l.bf16 %v1015
        %v1028 = vunpack.c.h.bf16 %v1015
        %v1029 = vunpack.c.l.bf16 %v1016
        %v1030 = vunpack.c.h.bf16 %v1016
        %v1031 = vunpack.c.l.bf16 %v1017
        %v1032 = vunpack.c.h.bf16 %v1017
        %v1033 = vunpack.c.l.bf16 %v1018
        %v1034 = vunpack.c.h.bf16 %v1018
        %1035 = vst [vmem:[%s217] sm:$0xff] %v1019
        %1036 = vst [vmem:[%s217 + $0x8] sm:$0xff] %v1020
        %1037 = vst [vmem:[%s217 + $0x10] sm:$0xff] %v1021
        %1038 = vst [vmem:[%s217 + $0x18] sm:$0xff] %v1022
        %1039 = vst [vmem:[%s217 + $0x20] sm:$0xff] %v1023
        %1040 = vst [vmem:[%s217 + $0x28] sm:$0xff] %v1024
        %1041 = vst [vmem:[%s217 + $0x30] sm:$0xff] %v1025
        %1042 = vst [vmem:[%s217 + $0x38] sm:$0xff] %v1026
        %1043 = vst [vmem:[%s217 + $0x40] sm:$0xff] %v1027
        %1044 = vst [vmem:[%s217 + $0x48] sm:$0xff] %v1028
        %1045 = vst [vmem:[%s217 + $0x50] sm:$0xff] %v1029
        %1046 = vst [vmem:[%s217 + $0x58] sm:$0xff] %v1030
        %1047 = vst [vmem:[%s217 + $0x60] sm:$0xff] %v1031
        %1048 = vst [vmem:[%s217 + $0x68] sm:$0xff] %v1032
        %1049 = vst [vmem:[%s217 + $0x70] sm:$0xff] %v1033
        %1050 = vst [vmem:[%s217 + $0x78] sm:$0xff] %v1034
        %s1051 = sand.u32 %s97, 1
        %s1052 = scalar_lea.sflag [#allocation4], %s1051
        %s1053 = sand.u32 %s97, 1
        %s1054 = smul.addr %s1053, 128
        %s1055 = scalar_lea.vmem [#allocation8], %s1054
        // Predicated region
        $region45: #{tpu_custom_call.1} parent=31 // pred_check
          %p1056 = pneg %p107
        $region46: #{tpu_custom_call.1} parent=31 // pred_check_branch
          %1058 = sbr.rel (%p1056) target = $region48
        $region47: #{tpu_custom_call.1} parent=31 // pred_region
          %s1059 = smul.u32 16, %s21
          %s1061 = ssub.s32 2048, 2048
          %1062 = vsyncadd %s1052, %s1061
          %s1063 = smul.addr %s1059, 128
          %s1064 = scalar_lea.hbm %s3, %s1063
          %s1065 = sshll.u32 %s1055, 4
          %s1066 = int_to_ptr.vmem [resolvable:$true] %s1065
          %1071 = dma.vmem_to_hbm [thread:$0]  %s1066, 2048, %s1064, %s1052, 128, 128, 8
        $region48: #{tpu_custom_call.1} parent=31 // pred_fallthru
          _
      $region32: #{tpu_custom_call.1} parent=5 // pred_fallthru
        _
      %p1072 = scmp.le.s32.totalorder 2, %s16
      // Predicated region
      $region49: #{tpu_custom_call.1} parent=5 // pred_check
        %p1073 = pneg %p1072
      $region50: #{tpu_custom_call.1} parent=5 // pred_check_branch
        %1075 = sbr.rel (%p1073) target = $region52
      $region51: #{tpu_custom_call.1} parent=5 // pred_region
        %s1076 = ssub.s32 %s16, 2
        // Predicated region
        $region53: #{tpu_custom_call.1} parent=51 // pred_check
          %p1077 = pneg %p113
        $region54: #{tpu_custom_call.1} parent=51 // pred_check_branch
          %1079 = sbr.rel (%p1077) target = $region56
        $region55: #{tpu_custom_call.1} parent=51 // pred_region
          %s1080 = sand.u32 %s98, 1
          %s1081 = scalar_lea.sflag [#allocation4], %s1080
          %s1082 = sand.u32 %s98, 1
          %s1083 = smul.addr %s1082, 128
          %s1084 = scalar_lea.vmem [#allocation8], %s1083
          %1085 = dma.done %s1081, 2048
        $region56: #{tpu_custom_call.1} parent=51 // pred_fallthru
          _
      $region52: #{tpu_custom_call.1} parent=5 // pred_fallthru
        _
    $region6: #{tpu_custom_call.1} parent=1 // loop_footer
      %s20 = sadd.s32 1, %s16
    $region7: #{tpu_custom_call.1} parent=1 // loop_footer_branch
      %15 = sbr.rel target = $region3
    $region8: #{tpu_custom_call.1} parent=1 // loop_exit
      _
    %1086 = vsyncpa [#allocation3], 1
    %s1087 = scalar_lea.sflag [#allocation3], 1
    %1088 = vsyncpa %s1087, 1
    %1089 = vsyncpa [#allocation6], 1
    %1090 = vsyncpa [#allocation4], 1
    %s1091 = scalar_lea.sflag [#allocation4], 1
    %1092 = vsyncpa %s1091, 1

</llo_original>
